<compile_context>
chip_gen: v7x
topology: tpu7x:2x2x1
jax: 0.10.0
libtpu: 0.0.40
codegen_flags: <defaults>
</compile_context>

<pallas_src>
import jax
import jax.numpy as jnp
import numpy as np
from jax.experimental import pallas as pl
from jax.experimental.pallas import tpu as pltpu

NEG_SLOPE = 0.01   # F.leaky_relu default
EPS = 1e-16        # torch_geometric softmax denominator epsilon


def gat_kernel(x_ref, xt_ref, wit_ref, wjt_ref,
               ii_col_ref, ij_col_ref, ii_row_ref, ij_row_ref,
               out_ref, sit_s, sjt_s, m_s, den_s):
    phase = pl.program_id(0)   # 0: running max + denominators, 1: normalize + aggregate
    blk = pl.program_id(1)     # edge block index

    N, D = x_ref.shape
    H = wit_ref.shape[0]
    EB = ii_col_ref.shape[0]   # edge block size

    # --- one-time init: hoisted node-score matmuls + state reset ------------
    @pl.when((phase == 0) & (blk == 0))
    def _():
        xt = xt_ref[...]                                             # [D, N]
        sit_s[...] = jnp.dot(wit_ref[...], xt,
                             preferred_element_type=jnp.float32)     # [H, N]
        sjt_s[...] = jnp.dot(wjt_ref[...], xt,
                             preferred_element_type=jnp.float32)     # [H, N]
        m_s[...] = jnp.full_like(m_s, -1e30)
        den_s[...] = jnp.zeros_like(den_s)

    # Node x edge one-hots for this block (exact 0/1; padded edges have idx==N
    # -> all-zero rows/columns, i.e. they are inert).
    sub_n = jax.lax.broadcasted_iota(jnp.int32, (N, EB), 0)
    oh_i_t = (sub_n == ii_row_ref[...]).astype(jnp.float32)          # [N, EB]
    oh_j_t = (sub_n == ij_row_ref[...]).astype(jnp.float32)          # [N, EB]

    # Edge scores for all heads at once, head-major (lane-dense): [H, EB].
    e = (jnp.dot(sit_s[...], oh_i_t, preferred_element_type=jnp.float32) +
         jnp.dot(sjt_s[...], oh_j_t, preferred_element_type=jnp.float32))
    e = jnp.where(e > 0, e, NEG_SLOPE * e)                           # leaky_relu

    @pl.when(phase == 0)
    def _():
        lane_n = jax.lax.broadcasted_iota(jnp.int32, (EB, N), 1)
        oh_i = (lane_n == ii_col_ref[...]).astype(jnp.float32)       # [EB, N]
        # Running per-head max with rescaling + per-target-node denominators.
        m_old = m_s[...]                                             # [H, 1]
        m_new = jnp.maximum(m_old, jnp.max(e, axis=1, keepdims=True))
        ex = jnp.exp(e - m_new)                                      # [H, EB]
        den_s[...] = (den_s[...] * jnp.exp(m_old - m_new) +
                      jnp.dot(ex, oh_i,
                              preferred_element_type=jnp.float32))   # [H, N]
        m_s[...] = m_new

    @pl.when(phase == 1)
    def _():
        @pl.when(blk == 0)
        def _():
            out_ref[...] = jnp.zeros_like(out_ref)

        lane_n = jax.lax.broadcasted_iota(jnp.int32, (EB, N), 1)
        oh_j = (lane_n == ij_col_ref[...]).astype(jnp.float32)       # [EB, N]

        ex = jnp.exp(e - m_s[...])                                   # [H, EB]
        den_e = jnp.dot(den_s[...], oh_i_t,
                        preferred_element_type=jnp.float32)          # [H, EB]
        alpha = ex * pl.reciprocal(den_e + EPS, approx=True)         # [H, EB]
        w = jnp.sum(alpha, axis=0, keepdims=True) * (1.0 / H)        # [1, EB]
        x_j = jnp.dot(oh_j, x_ref[...],
                      preferred_element_type=jnp.float32)            # [EB, D]
        # Fused scatter: out += oh_i_T @ diag(w) @ x_j, with w folded into the
        # one-hot via a free sublane-broadcast multiply.
        out_ref[...] += jnp.dot(oh_i_t * w, x_j,
                                preferred_element_type=jnp.float32)  # [N, D]


def gat_pallas(x, edge_index, wi, wj, *, edge_block=128):
    """x: [N, hidden] f32, edge_index: [2, E] int (row0 = src j, row1 = tgt i)."""
    x = x.astype(jnp.float32)
    N, D = x.shape
    H = wi.shape[1]
    E = edge_index.shape[1]

    n_eblk = max(1, -(-E // edge_block))
    e_pad = n_eblk * edge_block

    idx_j = edge_index[0].astype(jnp.int32)
    idx_i = edge_index[1].astype(jnp.int32)
    if e_pad != E:
        # Pad with node index N: padded edges are inert (see kernel comment).
        pad = jnp.full((e_pad - E,), N, dtype=jnp.int32)
        idx_j = jnp.concatenate([idx_j, pad])
        idx_i = jnp.concatenate([idx_i, pad])

    ii_col = idx_i.reshape(e_pad, 1)       # per-sublane layout (for [EB,N] one-hots)
    ij_col = idx_j.reshape(e_pad, 1)
    ii_row = idx_i.reshape(1, e_pad)       # per-lane layout (for [N,EB] one-hots)
    ij_row = idx_j.reshape(1, e_pad)

    xt = x.T                               # [D, N]  (host-side, free)
    wit = wi.astype(jnp.float32).T         # [H, D]
    wjt = wj.astype(jnp.float32).T         # [H, D]

    grid = (2, n_eblk)   # (phase, edge block); phase 0 finishes before phase 1

    in_specs = [
        pl.BlockSpec((N, D), lambda p, b: (0, 0)),           # x   (resident)
        pl.BlockSpec((D, N), lambda p, b: (0, 0)),           # x^T (resident)
        pl.BlockSpec((H, D), lambda p, b: (0, 0)),           # wi^T
        pl.BlockSpec((H, D), lambda p, b: (0, 0)),           # wj^T
        pl.BlockSpec((edge_block, 1), lambda p, b: (b, 0)),  # idx_i  [E,1]
        pl.BlockSpec((edge_block, 1), lambda p, b: (b, 0)),  # idx_j  [E,1]
        pl.BlockSpec((1, edge_block), lambda p, b: (0, b)),  # idx_i  [1,E]
        pl.BlockSpec((1, edge_block), lambda p, b: (0, b)),  # idx_j  [1,E]
    ]
    out_spec = pl.BlockSpec((N, D), lambda p, b: (0, 0))     # resident accumulator

    cost = pl.CostEstimate(
        flops=int(4 * H * D * N + e_pad * (12 * H * N + 4 * N * D)),
        transcendentals=int(3 * H * e_pad),
        bytes_accessed=int(4 * (3 * N * D + 2 * H * D + 4 * e_pad)))

    return pl.pallas_call(
        gat_kernel,
        out_shape=jax.ShapeDtypeStruct((N, D), jnp.float32),
        grid_spec=pltpu.PrefetchScalarGridSpec(
            num_scalar_prefetch=0,
            grid=grid,
            in_specs=in_specs,
            out_specs=out_spec,
            scratch_shapes=[
                pltpu.VMEM((H, N), jnp.float32),   # si^T = (x @ wi)^T  (hoisted)
                pltpu.VMEM((H, N), jnp.float32),   # sj^T = (x @ wj)^T  (hoisted)
                pltpu.VMEM((H, 1), jnp.float32),   # running per-head max
                pltpu.VMEM((H, N), jnp.float32),   # per-target softmax denominators
            ]),
        compiler_params=pltpu.CompilerParams(
            dimension_semantics=("arbitrary", "arbitrary"),
            vmem_limit_bytes=32 * 1024 * 1024),
        cost_estimate=cost,
    )(x, xt, wit, wjt, ii_col, ij_col, ii_row, ij_row)


def gat_reference(x, edge_index, wi, wj):
    """Pure-JAX reference mirroring the PyTorch/torch_geometric semantics."""
    N = x.shape[0]
    H = wi.shape[1]
    idx_j = edge_index[0]
    idx_i = edge_index[1]
    si = x @ wi
    sj = x @ wj
    e = si[idx_i] + sj[idx_j]
    e = jnp.where(e > 0, e, NEG_SLOPE * e)
    m = jax.ops.segment_max(e, idx_i, num_segments=N)
    ex = jnp.exp(e - m[idx_i])
    den = jax.ops.segment_sum(ex, idx_i, num_segments=N)
    alpha = ex / (den[idx_i] + EPS)
    w = alpha.sum(axis=1, keepdims=True) / H
    msg = w * x[idx_j]
    return jax.ops.segment_sum(msg, idx_i, num_segments=N)


if __name__ == "__main__":
    hidden = 32
    num_heads = 8
    N = 64     # number of nodes
    E = 250    # number of edges (not a multiple of the edge block -> padding path)

    key = jax.random.PRNGKey(0)
    kx, ke, kwi, kwj = jax.random.split(key, 4)

    x = jax.random.normal(kx, (N, hidden), dtype=jnp.float32)
    edge_index = jax.random.randint(ke, (2, E), 0, N, dtype=jnp.int32)
    # nn.Linear(hidden, 1, bias=False).weight has shape [1, hidden]; the
    # num_heads of them are stacked column-wise -> [hidden, num_heads].
    wi = jax.random.normal(kwi, (hidden, num_heads), dtype=jnp.float32) * 0.2
    wj = jax.random.normal(kwj, (hidden, num_heads), dtype=jnp.float32) * 0.2

    out = gat_pallas(x, edge_index, wi, wj)
    jax.block_until_ready(out)

    ref = gat_reference(x, edge_index, wi, wj)
    # Tolerance accounts for the approximate EUP reciprocal in the softmax.
    np.testing.assert_allclose(np.asarray(out), np.asarray(ref),
                               rtol=5e-3, atol=5e-3)
    print("KERNEL_OK")
</pallas_src>

<mosaic_0001>
module attributes {stable_mosaic.version = 11 : i64} {
  func.func @gat_kernel(%arg0: i32, %arg1: i32, %arg2: memref<64x32xf32, #tpu.memory_space<vmem>>, %arg3: memref<32x64xf32, #tpu.memory_space<vmem>>, %arg4: memref<8x32xf32, #tpu.memory_space<vmem>>, %arg5: memref<8x32xf32, #tpu.memory_space<vmem>>, %arg6: memref<128x1xi32, #tpu.memory_space<vmem>>, %arg7: memref<128x1xi32, #tpu.memory_space<vmem>>, %arg8: memref<1x128xi32, #tpu.memory_space<vmem>>, %arg9: memref<1x128xi32, #tpu.memory_space<vmem>>, %arg10: memref<64x32xf32, #tpu.memory_space<vmem>>, %arg11: memref<8x64xf32, #tpu.memory_space<vmem>>, %arg12: memref<8x64xf32, #tpu.memory_space<vmem>>, %arg13: memref<8x1xf32, #tpu.memory_space<vmem>>, %arg14: memref<8x64xf32, #tpu.memory_space<vmem>>) attributes {dimension_semantics = [#tpu.dimension_semantics<arbitrary>, #tpu.dimension_semantics<arbitrary>], iteration_bounds = array<i64: 2, 2>, scalar_prefetch = 0 : i64, scratch_operands = 4 : i64, tpu.core_type = #tpu.core_type<tc>, window_params = [{pipeline_mode = #tpu.pipeline_mode<synchronous>, transform_indices = @transform_0, window_bounds = array<i64: 64, 32>}, {pipeline_mode = #tpu.pipeline_mode<synchronous>, transform_indices = @transform_1, window_bounds = array<i64: 32, 64>}, {pipeline_mode = #tpu.pipeline_mode<synchronous>, transform_indices = @transform_2, window_bounds = array<i64: 8, 32>}, {pipeline_mode = #tpu.pipeline_mode<synchronous>, transform_indices = @transform_3, window_bounds = array<i64: 8, 32>}, {transform_indices = @transform_4, window_bounds = array<i64: 128, 1>}, {transform_indices = @transform_5, window_bounds = array<i64: 128, 1>}, {transform_indices = @transform_6, window_bounds = array<i64: 1, 128>}, {transform_indices = @transform_7, window_bounds = array<i64: 1, 128>}, {pipeline_mode = #tpu.pipeline_mode<synchronous>, transform_indices = @transform_8, window_bounds = array<i64: 64, 32>}]} {
    %c0_i32 = arith.constant 0 : i32
    %0 = arith.cmpi eq, %arg0, %c0_i32 : i32
    %c0_i32_0 = arith.constant 0 : i32
    %1 = arith.cmpi eq, %arg1, %c0_i32_0 : i32
    %2 = arith.andi %0, %1 : i1
    %3 = arith.extui %2 : i1 to i32
    %c0_i32_1 = arith.constant 0 : i32
    %4 = arith.cmpi ne, %3, %c0_i32_1 : i32
    scf.if %4 {
      %c0_15 = arith.constant 0 : index
      %c0_16 = arith.constant 0 : index
      %32 = vector.load %arg3[%c0_15, %c0_16] : memref<32x64xf32, #tpu.memory_space<vmem>>, vector<32x64xf32>
      %c0_17 = arith.constant 0 : index
      %c0_18 = arith.constant 0 : index
      %33 = vector.load %arg4[%c0_17, %c0_18] : memref<8x32xf32, #tpu.memory_space<vmem>>, vector<8x32xf32>
      %cst_19 = arith.constant dense<0.000000e+00> : vector<8x64xf32>
      %34 = tpu.matmul %33, %32, %cst_19 {dimension_numbers = #tpu.dot_dimension_numbers<[1], [0], [0], [1], [0, 0, 1, 1], [], []>} : vector<8x32xf32>, vector<32x64xf32>, vector<8x64xf32> -> vector<8x64xf32>
      %c0_20 = arith.constant 0 : index
      %c0_21 = arith.constant 0 : index
      %35 = vector.load %arg11[%c0_20, %c0_21] : memref<8x64xf32, #tpu.memory_space<vmem>>, vector<8x64xf32>
      tpu.vector_store %arg11[%c0_20, %c0_21], %34 {strides = array<i32>} : memref<8x64xf32, #tpu.memory_space<vmem>>, vector<8x64xf32>,
      %c0_22 = arith.constant 0 : index
      %c0_23 = arith.constant 0 : index
      %36 = vector.load %arg5[%c0_22, %c0_23] : memref<8x32xf32, #tpu.memory_space<vmem>>, vector<8x32xf32>
      %cst_24 = arith.constant dense<0.000000e+00> : vector<8x64xf32>
      %37 = tpu.matmul %36, %32, %cst_24 {dimension_numbers = #tpu.dot_dimension_numbers<[1], [0], [0], [1], [0, 0, 1, 1], [], []>} : vector<8x32xf32>, vector<32x64xf32>, vector<8x64xf32> -> vector<8x64xf32>
      %c0_25 = arith.constant 0 : index
      %c0_26 = arith.constant 0 : index
      %38 = vector.load %arg12[%c0_25, %c0_26] : memref<8x64xf32, #tpu.memory_space<vmem>>, vector<8x64xf32>
      tpu.vector_store %arg12[%c0_25, %c0_26], %37 {strides = array<i32>} : memref<8x64xf32, #tpu.memory_space<vmem>>, vector<8x64xf32>,
      %cst_27 = arith.constant -1.000000e+30 : f32
      %39 = vector.broadcast %cst_27 : f32 to vector<8x1xf32>
      %c0_28 = arith.constant 0 : index
      %c0_29 = arith.constant 0 : index
      %40 = vector.load %arg13[%c0_28, %c0_29] : memref<8x1xf32, #tpu.memory_space<vmem>>, vector<8x1xf32>
      tpu.vector_store %arg13[%c0_28, %c0_29], %39 {strides = array<i32>} : memref<8x1xf32, #tpu.memory_space<vmem>>, vector<8x1xf32>,
      %cst_30 = arith.constant 0.000000e+00 : f32
      %41 = vector.broadcast %cst_30 : f32 to vector<8x64xf32>
      %c0_31 = arith.constant 0 : index
      %c0_32 = arith.constant 0 : index
      %42 = vector.load %arg14[%c0_31, %c0_32] : memref<8x64xf32, #tpu.memory_space<vmem>>, vector<8x64xf32>
      tpu.vector_store %arg14[%c0_31, %c0_32], %41 {strides = array<i32>} : memref<8x64xf32, #tpu.memory_space<vmem>>, vector<8x64xf32>,
    } else {
    }
    %5 = tpu.iota {dimensions = array<i32: 0>} : vector<64x128xi32>
    %c0 = arith.constant 0 : index
    %c0_2 = arith.constant 0 : index
    %6 = vector.load %arg8[%c0, %c0_2] : memref<1x128xi32, #tpu.memory_space<vmem>>, vector<1x128xi32>
    %7 = vector.broadcast %6 : vector<1x128xi32> to vector<64x128xi32>
    %8 = arith.cmpi eq, %5, %7 : vector<64x128xi32>
    %9 = arith.extui %8 : vector<64x128xi1> to vector<64x128xi32>
    %10 = arith.sitofp %9 : vector<64x128xi32> to vector<64x128xf32>
    %c0_3 = arith.constant 0 : index
    %c0_4 = arith.constant 0 : index
    %11 = vector.load %arg9[%c0_3, %c0_4] : memref<1x128xi32, #tpu.memory_space<vmem>>, vector<1x128xi32>
    %12 = vector.broadcast %11 : vector<1x128xi32> to vector<64x128xi32>
    %13 = arith.cmpi eq, %5, %12 : vector<64x128xi32>
    %14 = arith.extui %13 : vector<64x128xi1> to vector<64x128xi32>
    %15 = arith.sitofp %14 : vector<64x128xi32> to vector<64x128xf32>
    %c0_5 = arith.constant 0 : index
    %c0_6 = arith.constant 0 : index
    %16 = vector.load %arg11[%c0_5, %c0_6] : memref<8x64xf32, #tpu.memory_space<vmem>>, vector<8x64xf32>
    %cst = arith.constant dense<0.000000e+00> : vector<8x128xf32>
    %17 = tpu.matmul %16, %10, %cst {dimension_numbers = #tpu.dot_dimension_numbers<[1], [0], [0], [1], [0, 0, 1, 1], [], []>} : vector<8x64xf32>, vector<64x128xf32>, vector<8x128xf32> -> vector<8x128xf32>
    %c0_7 = arith.constant 0 : index
    %c0_8 = arith.constant 0 : index
    %18 = vector.load %arg12[%c0_7, %c0_8] : memref<8x64xf32, #tpu.memory_space<vmem>>, vector<8x64xf32>
    %cst_9 = arith.constant dense<0.000000e+00> : vector<8x128xf32>
    %19 = tpu.matmul %18, %15, %cst_9 {dimension_numbers = #tpu.dot_dimension_numbers<[1], [0], [0], [1], [0, 0, 1, 1], [], []>} : vector<8x64xf32>, vector<64x128xf32>, vector<8x128xf32> -> vector<8x128xf32>
    %20 = arith.addf %17, %19 : vector<8x128xf32>
    %cst_10 = arith.constant 0.000000e+00 : f32
    %21 = vector.broadcast %cst_10 : f32 to vector<8x128xf32>
    %22 = arith.cmpf ogt, %20, %21 : vector<8x128xf32>
    %cst_11 = arith.constant 0.00999999977 : f32
    %23 = vector.broadcast %cst_11 : f32 to vector<8x128xf32>
    %24 = arith.mulf %23, %20 : vector<8x128xf32>
    %25 = arith.select %22, %20, %24 : vector<8x128xi1>, vector<8x128xf32>
    %c0_i32_12 = arith.constant 0 : i32
    %26 = arith.cmpi eq, %arg0, %c0_i32_12 : i32
    %27 = arith.extui %26 : i1 to i32
    %c0_i32_13 = arith.constant 0 : i32
    %28 = arith.cmpi ne, %27, %c0_i32_13 : i32
    scf.if %28 {
      %32 = tpu.iota {dimensions = array<i32: 1>} : vector<128x64xi32>
      %c0_15 = arith.constant 0 : index
      %c0_16 = arith.constant 0 : index
      %33 = vector.load %arg6[%c0_15, %c0_16] : memref<128x1xi32, #tpu.memory_space<vmem>>, vector<128x1xi32>
      %34 = vector.broadcast %33 : vector<128x1xi32> to vector<128x64xi32>
      %35 = arith.cmpi eq, %32, %34 : vector<128x64xi32>
      %36 = arith.extui %35 : vector<128x64xi1> to vector<128x64xi32>
      %37 = arith.sitofp %36 : vector<128x64xi32> to vector<128x64xf32>
      %c0_17 = arith.constant 0 : index
      %c0_18 = arith.constant 0 : index
      %38 = vector.load %arg13[%c0_17, %c0_18] : memref<8x1xf32, #tpu.memory_space<vmem>>, vector<8x1xf32>
      %cst_19 = arith.constant dense<0xFF800000> : vector<8xf32>
      %39 = vector.multi_reduction <maximumf>, %25, %cst_19 [1] : vector<8x128xf32> to vector<8xf32>
      %40 = vector.shape_cast %39 : vector<8xf32> to vector<8x1xf32>
      %41 = arith.maximumf %38, %40 : vector<8x1xf32>
      %42 = vector.broadcast %41 : vector<8x1xf32> to vector<8x128xf32>
      %43 = arith.subf %25, %42 : vector<8x128xf32>
      %44 = math.exp %43 : vector<8x128xf32>
      %c0_20 = arith.constant 0 : index
      %c0_21 = arith.constant 0 : index
      %45 = vector.load %arg14[%c0_20, %c0_21] : memref<8x64xf32, #tpu.memory_space<vmem>>, vector<8x64xf32>
      %46 = arith.subf %38, %41 : vector<8x1xf32>
      %47 = math.exp %46 : vector<8x1xf32>
      %48 = vector.broadcast %47 : vector<8x1xf32> to vector<8x64xf32>
      %49 = arith.mulf %45, %48 : vector<8x64xf32>
      %cst_22 = arith.constant dense<0.000000e+00> : vector<8x64xf32>
      %50 = tpu.matmul %44, %37, %cst_22 {dimension_numbers = #tpu.dot_dimension_numbers<[1], [0], [0], [1], [0, 0, 1, 1], [], []>} : vector<8x128xf32>, vector<128x64xf32>, vector<8x64xf32> -> vector<8x64xf32>
      %51 = arith.addf %49, %50 : vector<8x64xf32>
      %c0_23 = arith.constant 0 : index
      %c0_24 = arith.constant 0 : index
      %52 = vector.load %arg14[%c0_23, %c0_24] : memref<8x64xf32, #tpu.memory_space<vmem>>, vector<8x64xf32>
      tpu.vector_store %arg14[%c0_23, %c0_24], %51 {strides = array<i32>} : memref<8x64xf32, #tpu.memory_space<vmem>>, vector<8x64xf32>,
      %c0_25 = arith.constant 0 : index
      %c0_26 = arith.constant 0 : index
      %53 = vector.load %arg13[%c0_25, %c0_26] : memref<8x1xf32, #tpu.memory_space<vmem>>, vector<8x1xf32>
      tpu.vector_store %arg13[%c0_25, %c0_26], %41 {strides = array<i32>} : memref<8x1xf32, #tpu.memory_space<vmem>>, vector<8x1xf32>,
    } else {
    }
    %c1_i32 = arith.constant 1 : i32
    %29 = arith.cmpi eq, %arg0, %c1_i32 : i32
    %30 = arith.extui %29 : i1 to i32
    %c0_i32_14 = arith.constant 0 : i32
    %31 = arith.cmpi ne, %30, %c0_i32_14 : i32
    scf.if %31 {
      %c0_i32_15 = arith.constant 0 : i32
      %32 = arith.cmpi eq, %arg1, %c0_i32_15 : i32
      %33 = arith.extui %32 : i1 to i32
      %c0_i32_16 = arith.constant 0 : i32
      %34 = arith.cmpi ne, %33, %c0_i32_16 : i32
      scf.if %34 {
        %cst_35 = arith.constant 0.000000e+00 : f32
        %63 = vector.broadcast %cst_35 : f32 to vector<64x32xf32>
        %c0_36 = arith.constant 0 : index
        %c0_37 = arith.constant 0 : index
        %64 = vector.load %arg10[%c0_36, %c0_37] : memref<64x32xf32, #tpu.memory_space<vmem>>, vector<64x32xf32>
        tpu.vector_store %arg10[%c0_36, %c0_37], %63 {strides = array<i32>} : memref<64x32xf32, #tpu.memory_space<vmem>>, vector<64x32xf32>,
      } else {
      }
      %35 = tpu.iota {dimensions = array<i32: 1>} : vector<128x64xi32>
      %c0_17 = arith.constant 0 : index
      %c0_18 = arith.constant 0 : index
      %36 = vector.load %arg7[%c0_17, %c0_18] : memref<128x1xi32, #tpu.memory_space<vmem>>, vector<128x1xi32>
      %37 = vector.broadcast %36 : vector<128x1xi32> to vector<128x64xi32>
      %38 = arith.cmpi eq, %35, %37 : vector<128x64xi32>
      %39 = arith.extui %38 : vector<128x64xi1> to vector<128x64xi32>
      %40 = arith.sitofp %39 : vector<128x64xi32> to vector<128x64xf32>
      %c0_19 = arith.constant 0 : index
      %c0_20 = arith.constant 0 : index
      %41 = vector.load %arg13[%c0_19, %c0_20] : memref<8x1xf32, #tpu.memory_space<vmem>>, vector<8x1xf32>
      %42 = vector.broadcast %41 : vector<8x1xf32> to vector<8x128xf32>
      %43 = arith.subf %25, %42 : vector<8x128xf32>
      %44 = math.exp %43 : vector<8x128xf32>
      %c0_21 = arith.constant 0 : index
      %c0_22 = arith.constant 0 : index
      %45 = vector.load %arg14[%c0_21, %c0_22] : memref<8x64xf32, #tpu.memory_space<vmem>>, vector<8x64xf32>
      %cst_23 = arith.constant dense<0.000000e+00> : vector<8x128xf32>
      %46 = tpu.matmul %45, %10, %cst_23 {dimension_numbers = #tpu.dot_dimension_numbers<[1], [0], [0], [1], [0, 0, 1, 1], [], []>} : vector<8x64xf32>, vector<64x128xf32>, vector<8x128xf32> -> vector<8x128xf32>
      %cst_24 = arith.constant 1.000000e-16 : f32
      %47 = vector.broadcast %cst_24 : f32 to vector<8x128xf32>
      %48 = arith.addf %46, %47 : vector<8x128xf32>
      %49 = tpu.reciprocal %48 {approx = true} : vector<8x128xf32> -> vector<8x128xf32>
      %50 = arith.mulf %44, %49 : vector<8x128xf32>
      %cst_25 = arith.constant dense<0.000000e+00> : vector<128xf32>
      %51 = vector.multi_reduction <add>, %50, %cst_25 [0] : vector<8x128xf32> to vector<128xf32>
      %52 = vector.shape_cast %51 : vector<128xf32> to vector<1x128xf32>
      %cst_26 = arith.constant 1.250000e-01 : f32
      %53 = vector.broadcast %cst_26 : f32 to vector<1x128xf32>
      %54 = arith.mulf %52, %53 : vector<1x128xf32>
      %c0_27 = arith.constant 0 : index
      %c0_28 = arith.constant 0 : index
      %55 = vector.load %arg2[%c0_27, %c0_28] : memref<64x32xf32, #tpu.memory_space<vmem>>, vector<64x32xf32>
      %cst_29 = arith.constant dense<0.000000e+00> : vector<128x32xf32>
      %56 = tpu.matmul %40, %55, %cst_29 {dimension_numbers = #tpu.dot_dimension_numbers<[1], [0], [0], [1], [0, 0, 1, 1], [], []>} : vector<128x64xf32>, vector<64x32xf32>, vector<128x32xf32> -> vector<128x32xf32>
      %c0_30 = arith.constant 0 : index
      %c0_31 = arith.constant 0 : index
      %57 = vector.load %arg10[%c0_30, %c0_31] : memref<64x32xf32, #tpu.memory_space<vmem>>, vector<64x32xf32>
      %58 = vector.broadcast %54 : vector<1x128xf32> to vector<64x128xf32>
      %59 = arith.mulf %10, %58 : vector<64x128xf32>
      %cst_32 = arith.constant dense<0.000000e+00> : vector<64x32xf32>
      %60 = tpu.matmul %59, %56, %cst_32 {dimension_numbers = #tpu.dot_dimension_numbers<[1], [0], [0], [1], [0, 0, 1, 1], [], []>} : vector<64x128xf32>, vector<128x32xf32>, vector<64x32xf32> -> vector<64x32xf32>
      %61 = arith.addf %57, %60 : vector<64x32xf32>
      %c0_33 = arith.constant 0 : index
      %c0_34 = arith.constant 0 : index
      %62 = vector.load %arg10[%c0_33, %c0_34] : memref<64x32xf32, #tpu.memory_space<vmem>>, vector<64x32xf32>
      tpu.vector_store %arg10[%c0_33, %c0_34], %61 {strides = array<i32>} : memref<64x32xf32, #tpu.memory_space<vmem>>, vector<64x32xf32>,
    } else {
    }
    return
  }
  func.func @transform_0(%arg0: i32, %arg1: i32) -> (i32, i32) {
    %c0_i32 = arith.constant 0 : i32
    %c0_i32_0 = arith.constant 0 : i32
    %c0_i32_1 = arith.constant 0 : i32
    return %c0_i32, %c0_i32_0 : i32, i32
  }
  func.func @transform_1(%arg0: i32, %arg1: i32) -> (i32, i32) {
    %c0_i32 = arith.constant 0 : i32
    %c0_i32_0 = arith.constant 0 : i32
    %c0_i32_1 = arith.constant 0 : i32
    return %c0_i32, %c0_i32_0 : i32, i32
  }
  func.func @transform_2(%arg0: i32, %arg1: i32) -> (i32, i32) {
    %c0_i32 = arith.constant 0 : i32
    %c0_i32_0 = arith.constant 0 : i32
    %c0_i32_1 = arith.constant 0 : i32
    return %c0_i32, %c0_i32_0 : i32, i32
  }
  func.func @transform_3(%arg0: i32, %arg1: i32) -> (i32, i32) {
    %c0_i32 = arith.constant 0 : i32
    %c0_i32_0 = arith.constant 0 : i32
    %c0_i32_1 = arith.constant 0 : i32
    return %c0_i32, %c0_i32_0 : i32, i32
  }
  func.func @transform_4(%arg0: i32, %arg1: i32) -> (i32, i32) {
    %c0_i32 = arith.constant 0 : i32
    %c0_i32_0 = arith.constant 0 : i32
    return %arg1, %c0_i32 : i32, i32
  }
  func.func @transform_5(%arg0: i32, %arg1: i32) -> (i32, i32) {
    %c0_i32 = arith.constant 0 : i32
    %c0_i32_0 = arith.constant 0 : i32
    return %arg1, %c0_i32 : i32, i32
  }
  func.func @transform_6(%arg0: i32, %arg1: i32) -> (i32, i32) {
    %c0_i32 = arith.constant 0 : i32
    %c0_i32_0 = arith.constant 0 : i32
    return %c0_i32, %arg1 : i32, i32
  }
  func.func @transform_7(%arg0: i32, %arg1: i32) -> (i32, i32) {
    %c0_i32 = arith.constant 0 : i32
    %c0_i32_0 = arith.constant 0 : i32
    return %c0_i32, %arg1 : i32, i32
  }
  func.func @transform_8(%arg0: i32, %arg1: i32) -> (i32, i32) {
    %c0_i32 = arith.constant 0 : i32
    %c0_i32_0 = arith.constant 0 : i32
    %c0_i32_1 = arith.constant 0 : i32
    return %c0_i32, %c0_i32_0 : i32, i32
  }
}

</mosaic_0001>

<llo_original>
// kernel: tpu_custom_call.1
$region0: #{tpu_custom_call.1}
  #allocation0 [shape = 'u32[]', space=smem, size = 0x4, offset = 0x4, fixed_abs, tag = 'smem constant byte address 0x4 - core index']
  #allocation1 [shape = 'u32[144,128]{1,0:T(1,128)}', space=vmem, size = 0x12000, scoped, tag = 'internal scratch']
  #allocation2 [shape = 'f32[8,64]{1,0:T(8,128)}', space=vmem, size = 0x1000, scoped, tag = 'scratch operand']
  #allocation3 [shape = 'f32[8,64]{1,0:T(8,128)}', space=vmem, size = 0x1000, scoped, tag = 'scratch operand']
  #allocation4 [shape = 'f32[8,1]{1,0:T(8,128)}', space=vmem, size = 0x1000, scoped, tag = 'scratch operand']
  #allocation5 [shape = 'f32[8,64]{1,0:T(8,128)}', space=vmem, size = 0x1000, scoped, tag = 'scratch operand']
  %s0 = inlined_call_operand.vmem [shape: f32[64,32], index: 0, kind: input, shape index: {}]
  %s1 = inlined_call_operand.vmem [shape: f32[32,64], index: 1, kind: input, shape index: {}]
  %s2 = inlined_call_operand.vmem [shape: f32[8,32], index: 2, kind: input, shape index: {}]
  %s3 = inlined_call_operand.vmem [shape: f32[8,32], index: 3, kind: input, shape index: {}]
  %s4 = inlined_call_operand.vmem [shape: s32[256,1], index: 4, kind: input, shape index: {}]
  %s5 = inlined_call_operand.vmem [shape: s32[256,1], index: 5, kind: input, shape index: {}]
  %s6 = inlined_call_operand.vmem [shape: s32[1,256], index: 6, kind: input, shape index: {}]
  %s7 = inlined_call_operand.vmem [shape: s32[1,256], index: 7, kind: input, shape index: {}]
  %s8 = inlined_call_operand.vmem [shape: f32[64,32], index: 8, kind: output, shape index: {}]
  %s9 = sld [smem:[#allocation0]]
  $region81: #{tpu_custom_call.1} parent=0
    _
  %s11 = ssub.s32 1, %s9
  %s12 = scalar_select 0, %s11, %s9
  loop: start=0, step=1, limit=6
  $region2: #{tpu_custom_call.1} parent=0 // loop_pre_header
    _
  $region3: #{tpu_custom_call.1} parent=0 // loop_header
    %s14 = sphi 0, %s18
    %p15 = scmp.ge.s32.totalorder %s14, 6
    %s21 = sphi 0, %s33
    %s22 = sphi 0, %s29
    %s23 = sphi 0, %s21
    %s24 = sphi 0, %s22
    %s25 = sphi 0, %s23
    %s26 = sphi 0, %s24
    %s34 = sphi 0, %s34
    %s36 = sphi 0, %s34
    %s37 = sphi 0, %s36
    %s51 = sphi 0, %s37
    %s55 = sphi 0, %s55
    %s57 = sphi 0, %s55
    %s58 = sphi 0, %s57
    %s72 = sphi 0, %s58
    %s76 = sphi 0, %s76
    %s78 = sphi 0, %s76
    %s79 = sphi 0, %s78
    %s93 = sphi 0, %s79
    %s97 = sphi 0, %s97
    %s99 = sphi 0, %s97
    %s100 = sphi 0, %s99
    %s114 = sphi 0, %s100
    %s120 = sphi 0, %s122
    %s123 = sphi 0, %s120
    %s124 = sphi 0, %s123
    %s140 = sphi 0, %s124
    %s146 = sphi 0, %s148
    %s149 = sphi 0, %s146
    %s150 = sphi 0, %s149
    %s166 = sphi 0, %s150
    %s172 = sphi 0, %s174
    %s175 = sphi 0, %s172
    %s176 = sphi 0, %s175
    %s192 = sphi 0, %s176
    %s198 = sphi 0, %s200
    %s201 = sphi 0, %s198
    %s202 = sphi 0, %s201
    %s218 = sphi 0, %s202
    %s222 = sphi 0, %s222
    %s224 = sphi 0, %s222
    %s225 = sphi 0, %s224
    %s239 = sphi 0, %s225
  $region4: #{tpu_custom_call.1} parent=0 // loop_header_branch
    %17 = sbr.rel (%p15) target = $region8
  $region5: #{tpu_custom_call.1} parent=0 // loop_body
    %s19 = ssub.s32 %s14, 1
    %s20 = ssub.s32 %s14, 2
    %s27 = sadd.s32 1, %s22
    %p28 = scmp.ge.s32.totalorder %s27, 2
    %s29 = scalar_select %p28, 0, %s27
    %s30 = sadd.s32 1, %s21
    %s31 = scalar_select %p28, %s30, %s21
    %p32 = scmp.ge.s32.totalorder %s31, 2
    %s33 = scalar_select %p32, 0, %s31
    %s35 = sadd.s32 %s34, 1
    %p38 = scmp.eq.s32.totalorder %s14, 3
    %p39 = scmp.ne.s32.totalorder %s34, %s36
    %p40 = scmp.eq.s32.totalorder %s14, 0
    %p41 = por %p39, %p40
    %p42 = scmp.ne.s32.totalorder %s34, %s36
    %p43 = scmp.eq.s32.totalorder %s19, 3
    %p44 = por %p42, %p43
    %p45 = scmp.ne.s32.totalorder %s36, %s37
    %p46 = scmp.eq.s32.totalorder %s19, 0
    %p47 = por %p45, %p46
    %p48 = scmp.ne.s32.totalorder %s36, %s37
    %p49 = scmp.eq.s32.totalorder %s20, 3
    %p50 = por %p48, %p49
    %p52 = scmp.ne.s32.totalorder %s37, %s51
    %p53 = scmp.eq.s32.totalorder %s20, 0
    %p54 = por %p52, %p53
    %s56 = sadd.s32 %s55, 1
    %p59 = scmp.eq.s32.totalorder %s14, 3
    %p60 = scmp.ne.s32.totalorder %s55, %s57
    %p61 = scmp.eq.s32.totalorder %s14, 0
    %p62 = por %p60, %p61
    %p63 = scmp.ne.s32.totalorder %s55, %s57
    %p64 = scmp.eq.s32.totalorder %s19, 3
    %p65 = por %p63, %p64
    %p66 = scmp.ne.s32.totalorder %s57, %s58
    %p67 = scmp.eq.s32.totalorder %s19, 0
    %p68 = por %p66, %p67
    %p69 = scmp.ne.s32.totalorder %s57, %s58
    %p70 = scmp.eq.s32.totalorder %s20, 3
    %p71 = por %p69, %p70
    %p73 = scmp.ne.s32.totalorder %s58, %s72
    %p74 = scmp.eq.s32.totalorder %s20, 0
    %p75 = por %p73, %p74
    %s77 = sadd.s32 %s76, 1
    %p80 = scmp.eq.s32.totalorder %s14, 3
    %p81 = scmp.ne.s32.totalorder %s76, %s78
    %p82 = scmp.eq.s32.totalorder %s14, 0
    %p83 = por %p81, %p82
    %p84 = scmp.ne.s32.totalorder %s76, %s78
    %p85 = scmp.eq.s32.totalorder %s19, 3
    %p86 = por %p84, %p85
    %p87 = scmp.ne.s32.totalorder %s78, %s79
    %p88 = scmp.eq.s32.totalorder %s19, 0
    %p89 = por %p87, %p88
    %p90 = scmp.ne.s32.totalorder %s78, %s79
    %p91 = scmp.eq.s32.totalorder %s20, 3
    %p92 = por %p90, %p91
    %p94 = scmp.ne.s32.totalorder %s79, %s93
    %p95 = scmp.eq.s32.totalorder %s20, 0
    %p96 = por %p94, %p95
    %s98 = sadd.s32 %s97, 1
    %p101 = scmp.eq.s32.totalorder %s14, 3
    %p102 = scmp.ne.s32.totalorder %s97, %s99
    %p103 = scmp.eq.s32.totalorder %s14, 0
    %p104 = por %p102, %p103
    %p105 = scmp.ne.s32.totalorder %s97, %s99
    %p106 = scmp.eq.s32.totalorder %s19, 3
    %p107 = por %p105, %p106
    %p108 = scmp.ne.s32.totalorder %s99, %s100
    %p109 = scmp.eq.s32.totalorder %s19, 0
    %p110 = por %p108, %p109
    %p111 = scmp.ne.s32.totalorder %s99, %s100
    %p112 = scmp.eq.s32.totalorder %s20, 3
    %p113 = por %p111, %p112
    %p115 = scmp.ne.s32.totalorder %s100, %s114
    %p116 = scmp.eq.s32.totalorder %s20, 0
    %p117 = por %p115, %p116
    %s118 = ssub.s32 %s22, %s29
    %p119 = scmp.eq.s32.totalorder %s118, 0
    %s121 = sadd.s32 %s120, 1
    %s122 = scalar_select %p119, %s120, %s121
    %p125 = pneg %p119
    %p126 = scmp.eq.s32.totalorder %s14, 3
    %p127 = por %p125, %p126
    %p128 = scmp.ne.s32.totalorder %s120, %s123
    %p129 = scmp.eq.s32.totalorder %s14, 0
    %p130 = por %p128, %p129
    %p131 = scmp.ne.s32.totalorder %s120, %s123
    %p132 = scmp.eq.s32.totalorder %s19, 3
    %p133 = por %p131, %p132
    %p134 = scmp.ne.s32.totalorder %s123, %s124
    %p135 = scmp.eq.s32.totalorder %s19, 0
    %p136 = por %p134, %p135
    %p137 = scmp.ne.s32.totalorder %s123, %s124
    %p138 = scmp.eq.s32.totalorder %s20, 3
    %p139 = por %p137, %p138
    %p141 = scmp.ne.s32.totalorder %s124, %s140
    %p142 = scmp.eq.s32.totalorder %s20, 0
    %p143 = por %p141, %p142
    %s144 = ssub.s32 %s22, %s29
    %p145 = scmp.eq.s32.totalorder %s144, 0
    %s147 = sadd.s32 %s146, 1
    %s148 = scalar_select %p145, %s146, %s147
    %p151 = pneg %p145
    %p152 = scmp.eq.s32.totalorder %s14, 3
    %p153 = por %p151, %p152
    %p154 = scmp.ne.s32.totalorder %s146, %s149
    %p155 = scmp.eq.s32.totalorder %s14, 0
    %p156 = por %p154, %p155
    %p157 = scmp.ne.s32.totalorder %s146, %s149
    %p158 = scmp.eq.s32.totalorder %s19, 3
    %p159 = por %p157, %p158
    %p160 = scmp.ne.s32.totalorder %s149, %s150
    %p161 = scmp.eq.s32.totalorder %s19, 0
    %p162 = por %p160, %p161
    %p163 = scmp.ne.s32.totalorder %s149, %s150
    %p164 = scmp.eq.s32.totalorder %s20, 3
    %p165 = por %p163, %p164
    %p167 = scmp.ne.s32.totalorder %s150, %s166
    %p168 = scmp.eq.s32.totalorder %s20, 0
    %p169 = por %p167, %p168
    %s170 = ssub.s32 %s22, %s29
    %p171 = scmp.eq.s32.totalorder %s170, 0
    %s173 = sadd.s32 %s172, 1
    %s174 = scalar_select %p171, %s172, %s173
    %p177 = pneg %p171
    %p178 = scmp.eq.s32.totalorder %s14, 3
    %p179 = por %p177, %p178
    %p180 = scmp.ne.s32.totalorder %s172, %s175
    %p181 = scmp.eq.s32.totalorder %s14, 0
    %p182 = por %p180, %p181
    %p183 = scmp.ne.s32.totalorder %s172, %s175
    %p184 = scmp.eq.s32.totalorder %s19, 3
    %p185 = por %p183, %p184
    %p186 = scmp.ne.s32.totalorder %s175, %s176
    %p187 = scmp.eq.s32.totalorder %s19, 0
    %p188 = por %p186, %p187
    %p189 = scmp.ne.s32.totalorder %s175, %s176
    %p190 = scmp.eq.s32.totalorder %s20, 3
    %p191 = por %p189, %p190
    %p193 = scmp.ne.s32.totalorder %s176, %s192
    %p194 = scmp.eq.s32.totalorder %s20, 0
    %p195 = por %p193, %p194
    %s196 = ssub.s32 %s22, %s29
    %p197 = scmp.eq.s32.totalorder %s196, 0
    %s199 = sadd.s32 %s198, 1
    %s200 = scalar_select %p197, %s198, %s199
    %p203 = pneg %p197
    %p204 = scmp.eq.s32.totalorder %s14, 3
    %p205 = por %p203, %p204
    %p206 = scmp.ne.s32.totalorder %s198, %s201
    %p207 = scmp.eq.s32.totalorder %s14, 0
    %p208 = por %p206, %p207
    %p209 = scmp.ne.s32.totalorder %s198, %s201
    %p210 = scmp.eq.s32.totalorder %s19, 3
    %p211 = por %p209, %p210
    %p212 = scmp.ne.s32.totalorder %s201, %s202
    %p213 = scmp.eq.s32.totalorder %s19, 0
    %p214 = por %p212, %p213
    %p215 = scmp.ne.s32.totalorder %s201, %s202
    %p216 = scmp.eq.s32.totalorder %s20, 3
    %p217 = por %p215, %p216
    %p219 = scmp.ne.s32.totalorder %s202, %s218
    %p220 = scmp.eq.s32.totalorder %s20, 0
    %p221 = por %p219, %p220
    %s223 = sadd.s32 %s222, 1
    %p226 = scmp.eq.s32.totalorder %s14, 3
    %p227 = scmp.ne.s32.totalorder %s222, %s224
    %p228 = scmp.eq.s32.totalorder %s14, 0
    %p229 = por %p227, %p228
    %p230 = scmp.ne.s32.totalorder %s222, %s224
    %p231 = scmp.eq.s32.totalorder %s19, 3
    %p232 = por %p230, %p231
    %p233 = scmp.ne.s32.totalorder %s224, %s225
    %p234 = scmp.eq.s32.totalorder %s19, 0
    %p235 = por %p233, %p234
    %p236 = scmp.ne.s32.totalorder %s224, %s225
    %p237 = scmp.eq.s32.totalorder %s20, 3
    %p238 = por %p236, %p237
    %p240 = scmp.ne.s32.totalorder %s225, %s239
    %p241 = scmp.eq.s32.totalorder %s20, 0
    %p242 = por %p240, %p241
    %p243 = scmp.le.s32.totalorder 1, %s14
    %p244 = scmp.lt.s32.totalorder %s14, 5
    %p245 = pnand %p243, %p244
    %p246 = pneg %p245
    // Predicated region
    $region9: #{tpu_custom_call.1} parent=5 // pred_check
      _
    $region10: #{tpu_custom_call.1} parent=5 // pred_check_branch
      %248 = sbr.rel (%p245) target = $region12
    $region11: #{tpu_custom_call.1} parent=5 // pred_region
      %s249 = ssub.s32 %s14, 1
      // Predicated region
      $region13: #{tpu_custom_call.1} parent=11 // pred_check
        %p250 = pneg %p47
      $region14: #{tpu_custom_call.1} parent=11 // pred_check_branch
        %252 = sbr.rel (%p250) target = $region16
      $region15: #{tpu_custom_call.1} parent=11 // pred_region
        _
      $region16: #{tpu_custom_call.1} parent=11 // pred_fallthru
        _
      // Predicated region
      $region17: #{tpu_custom_call.1} parent=11 // pred_check
        %p253 = pneg %p68
      $region18: #{tpu_custom_call.1} parent=11 // pred_check_branch
        %255 = sbr.rel (%p253) target = $region20
      $region19: #{tpu_custom_call.1} parent=11 // pred_region
        _
      $region20: #{tpu_custom_call.1} parent=11 // pred_fallthru
        _
      // Predicated region
      $region21: #{tpu_custom_call.1} parent=11 // pred_check
        %p256 = pneg %p89
      $region22: #{tpu_custom_call.1} parent=11 // pred_check_branch
        %258 = sbr.rel (%p256) target = $region24
      $region23: #{tpu_custom_call.1} parent=11 // pred_region
        _
      $region24: #{tpu_custom_call.1} parent=11 // pred_fallthru
        _
      // Predicated region
      $region25: #{tpu_custom_call.1} parent=11 // pred_check
        %p259 = pneg %p110
      $region26: #{tpu_custom_call.1} parent=11 // pred_check_branch
        %261 = sbr.rel (%p259) target = $region28
      $region27: #{tpu_custom_call.1} parent=11 // pred_region
        _
      $region28: #{tpu_custom_call.1} parent=11 // pred_fallthru
        _
    $region12: #{tpu_custom_call.1} parent=5 // pred_fallthru
      _
    %p262 = scmp.lt.s32.totalorder %s14, 4
    // Predicated region
    $region29: #{tpu_custom_call.1} parent=5 // pred_check
      %p263 = pneg %p262
    $region30: #{tpu_custom_call.1} parent=5 // pred_check_branch
      %265 = sbr.rel (%p263) target = $region32
    $region31: #{tpu_custom_call.1} parent=5 // pred_region
      // Predicated region
      $region33: #{tpu_custom_call.1} parent=31 // pred_check
        %p266 = pneg %p130
      $region34: #{tpu_custom_call.1} parent=31 // pred_check_branch
        %268 = sbr.rel (%p266) target = $region36
      $region35: #{tpu_custom_call.1} parent=31 // pred_region
        %s269 = smul.u32 16, %s22
        %p270 = scmp.lt.s32.totalorder %s269, 31
        %s271 = scalar_select %p270, %s269, 31
        %s272 = smul.addr %s271, 8
        %s273 = scalar_lea.vmem %s4, %s272
        %s274 = smul.u32 16, %s22
      $region36: #{tpu_custom_call.1} parent=31 // pred_fallthru
        _
      // Predicated region
      $region37: #{tpu_custom_call.1} parent=31 // pred_check
        %p275 = pneg %p156
      $region38: #{tpu_custom_call.1} parent=31 // pred_check_branch
        %277 = sbr.rel (%p275) target = $region40
      $region39: #{tpu_custom_call.1} parent=31 // pred_region
        %s278 = smul.u32 16, %s22
        %p279 = scmp.lt.s32.totalorder %s278, 31
        %s280 = scalar_select %p279, %s278, 31
        %s281 = smul.addr %s280, 8
        %s282 = scalar_lea.vmem %s5, %s281
        %s283 = smul.u32 16, %s22
      $region40: #{tpu_custom_call.1} parent=31 // pred_fallthru
        _
      // Predicated region
      $region41: #{tpu_custom_call.1} parent=31 // pred_check
        %p284 = pneg %p182
      $region42: #{tpu_custom_call.1} parent=31 // pred_check_branch
        %286 = sbr.rel (%p284) target = $region44
      $region43: #{tpu_custom_call.1} parent=31 // pred_region
        %p287 = scmp.lt.s32.totalorder %s22, 1
        %s288 = scalar_select %p287, %s22, 1
        %s289 = scalar_lea.vmem %s6, %s288
      $region44: #{tpu_custom_call.1} parent=31 // pred_fallthru
        _
      // Predicated region
      $region45: #{tpu_custom_call.1} parent=31 // pred_check
        %p290 = pneg %p208
      $region46: #{tpu_custom_call.1} parent=31 // pred_check_branch
        %292 = sbr.rel (%p290) target = $region48
      $region47: #{tpu_custom_call.1} parent=31 // pred_region
        %p293 = scmp.lt.s32.totalorder %s22, 1
        %s294 = scalar_select %p293, %s22, 1
        %s295 = scalar_lea.vmem %s7, %s294
      $region48: #{tpu_custom_call.1} parent=31 // pred_fallthru
        _
    $region32: #{tpu_custom_call.1} parent=5 // pred_fallthru
      _
    %p296 = scmp.le.s32.totalorder 1, %s14
    %p297 = scmp.lt.s32.totalorder %s14, 5
    %p298 = pnand %p296, %p297
    %p299 = pneg %p298
    // Predicated region
    $region49: #{tpu_custom_call.1} parent=5 // pred_check
      _
    $region50: #{tpu_custom_call.1} parent=5 // pred_check_branch
      %301 = sbr.rel (%p298) target = $region52
    $region51: #{tpu_custom_call.1} parent=5 // pred_region
      %s302 = ssub.s32 %s14, 1
      %p303 = pneg %p47
      %p304 = pneg %p44
      %p305 = pneg %p68
      %p306 = pneg %p65
      %p307 = pneg %p89
      %p308 = pneg %p86
      %p309 = pneg %p110
      %p310 = pneg %p107
      %s311 = smul.u32 16, %s24
      %p312 = scmp.lt.s32.totalorder %s311, 31
      %s313 = scalar_select %p312, %s311, 31
      %s314 = smul.addr %s313, 8
      %s315 = scalar_lea.vmem %s4, %s314
      %p316 = pneg %p136
      %p317 = pneg %p133
      %s318 = smul.u32 16, %s24
      %p319 = scmp.lt.s32.totalorder %s318, 31
      %s320 = scalar_select %p319, %s318, 31
      %s321 = smul.addr %s320, 8
      %s322 = scalar_lea.vmem %s5, %s321
      %p323 = pneg %p162
      %p324 = pneg %p159
      %p325 = scmp.lt.s32.totalorder %s24, 1
      %s326 = scalar_select %p325, %s24, 1
      %s327 = scalar_lea.vmem %s6, %s326
      %p328 = pneg %p188
      %p329 = pneg %p185
      %p330 = scmp.lt.s32.totalorder %s24, 1
      %s331 = scalar_select %p330, %s24, 1
      %s332 = scalar_lea.vmem %s7, %s331
      %p333 = pneg %p214
      %p334 = pneg %p211
      %p335 = pneg %p235
      %p336 = pneg %p232
      %s337 = smul.u32 16, %s24
      %p338 = scmp.lt.s32.totalorder %s337, 31
      %s339 = scalar_select %p338, %s337, 31
      %s340 = smul.addr %s339, 8
      %s341 = scalar_lea.vmem %s4, %s340
      %s342 = smul.u32 16, %s24
      %s343 = smul.u32 16, %s24
      %p344 = scmp.lt.s32.totalorder %s343, 31
      %s345 = scalar_select %p344, %s343, 31
      %s346 = smul.addr %s345, 8
      %s347 = scalar_lea.vmem %s5, %s346
      %s348 = smul.u32 16, %s24
      %p349 = scmp.lt.s32.totalorder %s24, 1
      %s350 = scalar_select %p349, %s24, 1
      %s351 = scalar_lea.vmem %s6, %s350
      %p352 = scmp.lt.s32.totalorder %s24, 1
      %s353 = scalar_select %p352, %s24, 1
      %s354 = scalar_lea.vmem %s7, %s353
      %p355 = scmp.eq.s32.totalorder %s23, 0
      %p356 = scmp.eq.s32.totalorder %s24, 0
      %p357 = pnand %p355, %p356
      %p358 = pneg %p357
      // Predicated region
      $region53: #{tpu_custom_call.1} parent=51 // pred_check
        _
      $region54: #{tpu_custom_call.1} parent=51 // pred_check_branch
        %360 = sbr.rel (%p357) target = $region56
      $region55: #{tpu_custom_call.1} parent=51 // pred_region
        %v361 = vld [vmem:[%s1] sm:$0xff]
        %v362 = vld [vmem:[%s1 + $0x8] sm:$0xff]
        %v363 = vld [vmem:[%s1 + $0x10] sm:$0xff]
        %v364 = vld [vmem:[%s1 + $0x18] sm:$0xff]
        %v365 = vld [vmem:[%s2] sm:$0xff]
        %vm366 = vcmask 261120
        %v368 = vsel %vm366, %v365, 0
        %370 = vmatprep.subr.mxu0 0.0
        %371 = vmatpush1.msra.mxu0 %v361
        %372 = vmatprep.subr.mxu0 0.0
        %373 = vmatpush1.msra.mxu0 %v362
        %374 = vmatprep.subr.mxu0 0.0
        %375 = vmatpush1.msra.mxu0 %v363
        %376 = vmatprep.subr.mxu0 0.0
        %377 = vmatpush1.msra.mxu0 %v364
        %378 = vmatprep.subr.mxu0 0.0
        %379 = vmatpush1.msra.mxu0 0.0
        %380 = vmatprep.subr.mxu0 0.0
        %381 = vmatpush1.msra.mxu0 0.0
        %382 = vmatprep.subr.mxu0 0.0
        %383 = vmatpush1.msra.mxu0 0.0
        %384 = vmatprep.subr.mxu0 0.0
        %385 = vmatpush1.msra.mxu0 0.0
        %386 = vmatprep.subr.mxu0 0.0
        %387 = vmatpush1.msra.mxu0 0.0
        %388 = vmatprep.subr.mxu0 0.0
        %389 = vmatpush1.msra.mxu0 0.0
        %390 = vmatprep.subr.mxu0 0.0
        %391 = vmatpush1.msra.mxu0 0.0
        %392 = vmatprep.subr.mxu0 0.0
        %393 = vmatpush1.msra.mxu0 0.0
        %394 = vmatprep.subr.mxu0 0.0
        %395 = vmatpush1.msra.mxu0 0.0
        %396 = vmatprep.subr.mxu0 0.0
        %397 = vmatpush1.msra.mxu0 0.0
        %398 = vmatprep.subr.mxu0 0.0
        %399 = vmatpush1.msra.mxu0 0.0
        %400 = vmatprep.subr.mxu0 0.0
        %401 = vmatpush1.msra.mxu0 0.0
        %402 = vmatprep.subr.mxu0 0.0
        %403 = vmatpush1.msra.mxu0 0.0
        %404 = vmatprep.subr.mxu0 0.0
        %405 = vmatpush1.msra.mxu0 0.0
        %406 = vmatprep.subr.mxu0 0.0
        %407 = vmatpush1.msra.mxu0 0.0
        %408 = vmatprep.subr.mxu0 0.0
        %409 = vmatpush1.msra.mxu0 0.0
        %410 = vmatprep.subr.mxu0 0.0
        %411 = vmatpush1.msra.mxu0 0.0
        %412 = vmatprep.subr.mxu0 0.0
        %413 = vmatpush1.msra.mxu0 0.0
        %414 = vmatprep.subr.mxu0 0.0
        %415 = vmatpush1.msra.mxu0 0.0
        %416 = vmatprep.subr.mxu0 0.0
        %417 = vmatpush1.msra.mxu0 0.0
        %418 = vmatprep.subr.mxu0 0.0
        %419 = vmatpush1.msra.mxu0 0.0
        %420 = vmatprep.subr.mxu0 0.0
        %421 = vmatpush1.msra.mxu0 0.0
        %422 = vmatprep.subr.mxu0 0.0
        %423 = vmatpush1.msra.mxu0 0.0
        %424 = vmatprep.subr.mxu0 0.0
        %425 = vmatpush1.msra.mxu0 0.0
        %426 = vmatprep.subr.mxu0 0.0
        %427 = vmatpush1.msra.mxu0 0.0
        %428 = vmatprep.subr.mxu0 0.0
        %429 = vmatpush1.msra.mxu0 0.0
        %430 = vmatprep.subr.mxu0 0.0
        %431 = vmatpush1.msra.mxu0 0.0
        %432 = vmatprep.subr.mxu0 0.0
        %433 = vmatpush1.msra.mxu0 0.0
        %434 = vmatprep.mubr.f32.mxu0 0.0
        %435 = vmatmul.mubr.f32.gmra.mrb[0].mxu0 %v368
        %v436 = vpop.f32.mrb[0].mxu0
        %v437 = vadd.f32 0.0, %v436
        %v438 = vpop.f32.mrb[0].mxu0
        %439 = vdwg.mxu0
        %vm440 = vcmask 523264
        %441 = vst.msk [vmem:[#allocation2] sm:$0xff] %vm440, %v437
        %v442 = vld [vmem:[%s3] sm:$0xff]
        %v444 = vsel %vm366, %v442, 0
        %446 = vmatprep.subr.mxu0 0.0
        %447 = vmatpush1.msra.mxu0 %v361
        %448 = vmatprep.subr.mxu0 0.0
        %449 = vmatpush1.msra.mxu0 %v362
        %450 = vmatprep.subr.mxu0 0.0
        %451 = vmatpush1.msra.mxu0 %v363
        %452 = vmatprep.subr.mxu0 0.0
        %453 = vmatpush1.msra.mxu0 %v364
        %454 = vmatprep.subr.mxu0 0.0
        %455 = vmatpush1.msra.mxu0 0.0
        %456 = vmatprep.subr.mxu0 0.0
        %457 = vmatpush1.msra.mxu0 0.0
        %458 = vmatprep.subr.mxu0 0.0
        %459 = vmatpush1.msra.mxu0 0.0
        %460 = vmatprep.subr.mxu0 0.0
        %461 = vmatpush1.msra.mxu0 0.0
        %462 = vmatprep.subr.mxu0 0.0
        %463 = vmatpush1.msra.mxu0 0.0
        %464 = vmatprep.subr.mxu0 0.0
        %465 = vmatpush1.msra.mxu0 0.0
        %466 = vmatprep.subr.mxu0 0.0
        %467 = vmatpush1.msra.mxu0 0.0
        %468 = vmatprep.subr.mxu0 0.0
        %469 = vmatpush1.msra.mxu0 0.0
        %470 = vmatprep.subr.mxu0 0.0
        %471 = vmatpush1.msra.mxu0 0.0
        %472 = vmatprep.subr.mxu0 0.0
        %473 = vmatpush1.msra.mxu0 0.0
        %474 = vmatprep.subr.mxu0 0.0
        %475 = vmatpush1.msra.mxu0 0.0
        %476 = vmatprep.subr.mxu0 0.0
        %477 = vmatpush1.msra.mxu0 0.0
        %478 = vmatprep.subr.mxu0 0.0
        %479 = vmatpush1.msra.mxu0 0.0
        %480 = vmatprep.subr.mxu0 0.0
        %481 = vmatpush1.msra.mxu0 0.0
        %482 = vmatprep.subr.mxu0 0.0
        %483 = vmatpush1.msra.mxu0 0.0
        %484 = vmatprep.subr.mxu0 0.0
        %485 = vmatpush1.msra.mxu0 0.0
        %486 = vmatprep.subr.mxu0 0.0
        %487 = vmatpush1.msra.mxu0 0.0
        %488 = vmatprep.subr.mxu0 0.0
        %489 = vmatpush1.msra.mxu0 0.0
        %490 = vmatprep.subr.mxu0 0.0
        %491 = vmatpush1.msra.mxu0 0.0
        %492 = vmatprep.subr.mxu0 0.0
        %493 = vmatpush1.msra.mxu0 0.0
        %494 = vmatprep.subr.mxu0 0.0
        %495 = vmatpush1.msra.mxu0 0.0
        %496 = vmatprep.subr.mxu0 0.0
        %497 = vmatpush1.msra.mxu0 0.0
        %498 = vmatprep.subr.mxu0 0.0
        %499 = vmatpush1.msra.mxu0 0.0
        %500 = vmatprep.subr.mxu0 0.0
        %501 = vmatpush1.msra.mxu0 0.0
        %502 = vmatprep.subr.mxu0 0.0
        %503 = vmatpush1.msra.mxu0 0.0
        %504 = vmatprep.subr.mxu0 0.0
        %505 = vmatpush1.msra.mxu0 0.0
        %506 = vmatprep.subr.mxu0 0.0
        %507 = vmatpush1.msra.mxu0 0.0
        %508 = vmatprep.subr.mxu0 0.0
        %509 = vmatpush1.msra.mxu0 0.0
        %510 = vmatprep.mubr.f32.mxu0 0.0
        %511 = vmatmul.mubr.f32.gmra.mrb[0].mxu0 %v444
        %v512 = vpop.f32.mrb[0].mxu0
        %v513 = vadd.f32 0.0, %v512
        %v514 = vpop.f32.mrb[0].mxu0
        %515 = vdwg.mxu0
        %516 = vst.msk [vmem:[#allocation3] sm:$0xff] %vm440, %v513
        %vm517 = vcmask 7168
        %518 = vst.msk [vmem:[#allocation4] sm:$0xff] %vm517, -1e+30
        %519 = vst.msk [vmem:[#allocation5] sm:$0xff] %vm440, 0.0
      $region56: #{tpu_custom_call.1} parent=51 // pred_fallthru
        _
      %v520 = vlaneseq
      %v521 = vshrl.u32 %v520, 7
      %v522 = vadd.s32 %v521, 8
      %v523 = vadd.s32 %v521, 16
      %v524 = vadd.s32 %v521, 24
      %v525 = vadd.s32 %v521, 32
      %v526 = vadd.s32 %v521, 40
      %v527 = vadd.s32 %v521, 48
      %v528 = vadd.s32 %v521, 56
      %v529 = vld [vmem:[%s351] sm:$0x1]
      %v530 = vlaneseq
      %v531 = vshrl.u32 %v530, 7
      %v532 = vsub.s32 0, %v531
      %v533 = vrot.slane %v529, %v532
      %vm534 = vcmp.eq.s32.totalorder %v521, %v533
      %vm535 = vcmp.eq.s32.totalorder %v522, %v533
      %vm536 = vcmp.eq.s32.totalorder %v523, %v533
      %vm537 = vcmp.eq.s32.totalorder %v524, %v533
      %vm538 = vcmp.eq.s32.totalorder %v525, %v533
      %vm539 = vcmp.eq.s32.totalorder %v526, %v533
      %vm540 = vcmp.eq.s32.totalorder %v527, %v533
      %vm541 = vcmp.eq.s32.totalorder %v528, %v533
      %v542 = vsel %vm534, 1, 0
      %v543 = vsel %vm535, 1, 0
      %v544 = vsel %vm536, 1, 0
      %v545 = vsel %vm537, 1, 0
      %v546 = vsel %vm538, 1, 0
      %v547 = vsel %vm539, 1, 0
      %v548 = vsel %vm540, 1, 0
      %v549 = vsel %vm541, 1, 0
      %v550 = vcvt.s32.f32 %v542
      %v551 = vcvt.s32.f32 %v543
      %v552 = vcvt.s32.f32 %v544
      %v553 = vcvt.s32.f32 %v545
      %v554 = vcvt.s32.f32 %v546
      %v555 = vcvt.s32.f32 %v547
      %v556 = vcvt.s32.f32 %v548
      %v557 = vcvt.s32.f32 %v549
      %v558 = vld [vmem:[%s354] sm:$0x1]
      %v559 = vlaneseq
      %v560 = vshrl.u32 %v559, 7
      %v561 = vsub.s32 0, %v560
      %v562 = vrot.slane %v558, %v561
      %vm563 = vcmp.eq.s32.totalorder %v521, %v562
      %vm564 = vcmp.eq.s32.totalorder %v522, %v562
      %vm565 = vcmp.eq.s32.totalorder %v523, %v562
      %vm566 = vcmp.eq.s32.totalorder %v524, %v562
      %vm567 = vcmp.eq.s32.totalorder %v525, %v562
      %vm568 = vcmp.eq.s32.totalorder %v526, %v562
      %vm569 = vcmp.eq.s32.totalorder %v527, %v562
      %vm570 = vcmp.eq.s32.totalorder %v528, %v562
      %v571 = vsel %vm563, 1, 0
      %v572 = vsel %vm564, 1, 0
      %v573 = vsel %vm565, 1, 0
      %v574 = vsel %vm566, 1, 0
      %v575 = vsel %vm567, 1, 0
      %v576 = vsel %vm568, 1, 0
      %v577 = vsel %vm569, 1, 0
      %v578 = vsel %vm570, 1, 0
      %v579 = vcvt.s32.f32 %v571
      %v580 = vcvt.s32.f32 %v572
      %v581 = vcvt.s32.f32 %v573
      %v582 = vcvt.s32.f32 %v574
      %v583 = vcvt.s32.f32 %v575
      %v584 = vcvt.s32.f32 %v576
      %v585 = vcvt.s32.f32 %v577
      %v586 = vcvt.s32.f32 %v578
      %v587 = vld [vmem:[#allocation2] sm:$0xff]
      %v588 = vld [vmem:[#allocation3] sm:$0xff]
      %vm589 = vcmask 523264
      %v591 = vsel %vm589, %v588, 0
      %593 = vmatprep.subr.mxu0 0.0
      %594 = vmatpush1.msra.mxu0 %v579
      %595 = vmatprep.subr.mxu0 0.0
      %596 = vmatpush1.msra.mxu0 %v580
      %597 = vmatprep.subr.mxu0 0.0
      %598 = vmatpush1.msra.mxu0 %v581
      %599 = vmatprep.subr.mxu0 0.0
      %600 = vmatpush1.msra.mxu0 %v582
      %601 = vmatprep.subr.mxu0 0.0
      %602 = vmatpush1.msra.mxu0 %v583
      %603 = vmatprep.subr.mxu0 0.0
      %604 = vmatpush1.msra.mxu0 %v584
      %605 = vmatprep.subr.mxu0 0.0
      %606 = vmatpush1.msra.mxu0 %v585
      %607 = vmatprep.subr.mxu0 0.0
      %608 = vmatpush1.msra.mxu0 %v586
      %609 = vmatprep.subr.mxu0 0.0
      %610 = vmatpush1.msra.mxu0 0.0
      %611 = vmatprep.subr.mxu0 0.0
      %612 = vmatpush1.msra.mxu0 0.0
      %613 = vmatprep.subr.mxu0 0.0
      %614 = vmatpush1.msra.mxu0 0.0
      %615 = vmatprep.subr.mxu0 0.0
      %616 = vmatpush1.msra.mxu0 0.0
      %617 = vmatprep.subr.mxu0 0.0
      %618 = vmatpush1.msra.mxu0 0.0
      %619 = vmatprep.subr.mxu0 0.0
      %620 = vmatpush1.msra.mxu0 0.0
      %621 = vmatprep.subr.mxu0 0.0
      %622 = vmatpush1.msra.mxu0 0.0
      %623 = vmatprep.subr.mxu0 0.0
      %624 = vmatpush1.msra.mxu0 0.0
      %625 = vmatprep.subr.mxu0 0.0
      %626 = vmatpush1.msra.mxu0 0.0
      %627 = vmatprep.subr.mxu0 0.0
      %628 = vmatpush1.msra.mxu0 0.0
      %629 = vmatprep.subr.mxu0 0.0
      %630 = vmatpush1.msra.mxu0 0.0
      %631 = vmatprep.subr.mxu0 0.0
      %632 = vmatpush1.msra.mxu0 0.0
      %633 = vmatprep.subr.mxu0 0.0
      %634 = vmatpush1.msra.mxu0 0.0
      %635 = vmatprep.subr.mxu0 0.0
      %636 = vmatpush1.msra.mxu0 0.0
      %637 = vmatprep.subr.mxu0 0.0
      %638 = vmatpush1.msra.mxu0 0.0
      %639 = vmatprep.subr.mxu0 0.0
      %640 = vmatpush1.msra.mxu0 0.0
      %641 = vmatprep.subr.mxu0 0.0
      %642 = vmatpush1.msra.mxu0 0.0
      %643 = vmatprep.subr.mxu0 0.0
      %644 = vmatpush1.msra.mxu0 0.0
      %645 = vmatprep.subr.mxu0 0.0
      %646 = vmatpush1.msra.mxu0 0.0
      %647 = vmatprep.subr.mxu0 0.0
      %648 = vmatpush1.msra.mxu0 0.0
      %649 = vmatprep.subr.mxu0 0.0
      %650 = vmatpush1.msra.mxu0 0.0
      %651 = vmatprep.subr.mxu0 0.0
      %652 = vmatpush1.msra.mxu0 0.0
      %653 = vmatprep.subr.mxu0 0.0
      %654 = vmatpush1.msra.mxu0 0.0
      %655 = vmatprep.subr.mxu0 0.0
      %656 = vmatpush1.msra.mxu0 0.0
      %657 = vmatprep.mubr.f32.mxu0 0.0
      %658 = vmatmul.mubr.f32.gmra.mrb[0].mxu0 %v591
      %v659 = vpop.f32.mrb[0].mxu0
      %v660 = vadd.f32 0.0, %v659
      %v661 = vpop.f32.mrb[0].mxu0
      %662 = vdwg.mxu0
      %v664 = vsel %vm589, %v587, 0
      %666 = vmatprep.subr.mxu0 0.0
      %667 = vmatpush1.msra.mxu0 %v550
      %668 = vmatprep.subr.mxu0 0.0
      %669 = vmatpush1.msra.mxu0 %v551
      %670 = vmatprep.subr.mxu0 0.0
      %671 = vmatpush1.msra.mxu0 %v552
      %672 = vmatprep.subr.mxu0 0.0
      %673 = vmatpush1.msra.mxu0 %v553
      %674 = vmatprep.subr.mxu0 0.0
      %675 = vmatpush1.msra.mxu0 %v554
      %676 = vmatprep.subr.mxu0 0.0
      %677 = vmatpush1.msra.mxu0 %v555
      %678 = vmatprep.subr.mxu0 0.0
      %679 = vmatpush1.msra.mxu0 %v556
      %680 = vmatprep.subr.mxu0 0.0
      %681 = vmatpush1.msra.mxu0 %v557
      %682 = vmatprep.subr.mxu0 0.0
      %683 = vmatpush1.msra.mxu0 0.0
      %684 = vmatprep.subr.mxu0 0.0
      %685 = vmatpush1.msra.mxu0 0.0
      %686 = vmatprep.subr.mxu0 0.0
      %687 = vmatpush1.msra.mxu0 0.0
      %688 = vmatprep.subr.mxu0 0.0
      %689 = vmatpush1.msra.mxu0 0.0
      %690 = vmatprep.subr.mxu0 0.0
      %691 = vmatpush1.msra.mxu0 0.0
      %692 = vmatprep.subr.mxu0 0.0
      %693 = vmatpush1.msra.mxu0 0.0
      %694 = vmatprep.subr.mxu0 0.0
      %695 = vmatpush1.msra.mxu0 0.0
      %696 = vmatprep.subr.mxu0 0.0
      %697 = vmatpush1.msra.mxu0 0.0
      %698 = vmatprep.subr.mxu0 0.0
      %699 = vmatpush1.msra.mxu0 0.0
      %700 = vmatprep.subr.mxu0 0.0
      %701 = vmatpush1.msra.mxu0 0.0
      %702 = vmatprep.subr.mxu0 0.0
      %703 = vmatpush1.msra.mxu0 0.0
      %704 = vmatprep.subr.mxu0 0.0
      %705 = vmatpush1.msra.mxu0 0.0
      %706 = vmatprep.subr.mxu0 0.0
      %707 = vmatpush1.msra.mxu0 0.0
      %708 = vmatprep.subr.mxu0 0.0
      %709 = vmatpush1.msra.mxu0 0.0
      %710 = vmatprep.subr.mxu0 0.0
      %711 = vmatpush1.msra.mxu0 0.0
      %712 = vmatprep.subr.mxu0 0.0
      %713 = vmatpush1.msra.mxu0 0.0
      %714 = vmatprep.subr.mxu0 0.0
      %715 = vmatpush1.msra.mxu0 0.0
      %716 = vmatprep.subr.mxu0 0.0
      %717 = vmatpush1.msra.mxu0 0.0
      %718 = vmatprep.subr.mxu0 0.0
      %719 = vmatpush1.msra.mxu0 0.0
      %720 = vmatprep.subr.mxu0 0.0
      %721 = vmatpush1.msra.mxu0 0.0
      %722 = vmatprep.subr.mxu0 0.0
      %723 = vmatpush1.msra.mxu0 0.0
      %724 = vmatprep.subr.mxu0 0.0
      %725 = vmatpush1.msra.mxu0 0.0
      %726 = vmatprep.subr.mxu0 0.0
      %727 = vmatpush1.msra.mxu0 0.0
      %728 = vmatprep.subr.mxu0 0.0
      %729 = vmatpush1.msra.mxu0 0.0
      %730 = vmatprep.mubr.f32.mxu0 0.0
      %731 = vmatmul.mubr.f32.gmra.mrb[0].mxu0 %v664
      %v732 = vpop.f32.mrb[0].mxu0
      %v733 = vadd.f32 %v660, %v732
      %v734 = vpop.f32.mrb[0].mxu0
      %735 = vdwg.mxu0
      %vm736 = vcmp.gt.f32.partialorder %v733, 0.0
      %v737 = vmul.f32 %v733, 0.01
      %v738 = vsel %vm736, %v733, %v737
      // Predicated region
      $region57: #{tpu_custom_call.1} parent=51 // pred_check
        %p739 = pneg %p355
      $region58: #{tpu_custom_call.1} parent=51 // pred_check_branch
        %741 = sbr.rel (%p739) target = $region60
      $region59: #{tpu_custom_call.1} parent=51 // pred_region
        %v742 = vlaneseq
        %v743 = vand.u32 %v742, 127
        %v744 = vld [vmem:[%s341] sm:$0xff]
        %v745 = vld [vmem:[%s341 + $0x8] sm:$0xff]
        %v746 = vld [vmem:[%s341 + $0x10] sm:$0xff]
        %v747 = vld [vmem:[%s341 + $0x18] sm:$0xff]
        %v748 = vld [vmem:[%s341 + $0x20] sm:$0xff]
        %v749 = vld [vmem:[%s341 + $0x28] sm:$0xff]
        %v750 = vld [vmem:[%s341 + $0x30] sm:$0xff]
        %v751 = vld [vmem:[%s341 + $0x38] sm:$0xff]
        %v752 = vld [vmem:[%s341 + $0x40] sm:$0xff]
        %v753 = vld [vmem:[%s341 + $0x48] sm:$0xff]
        %v754 = vld [vmem:[%s341 + $0x50] sm:$0xff]
        %v755 = vld [vmem:[%s341 + $0x58] sm:$0xff]
        %v756 = vld [vmem:[%s341 + $0x60] sm:$0xff]
        %v757 = vld [vmem:[%s341 + $0x68] sm:$0xff]
        %v758 = vld [vmem:[%s341 + $0x70] sm:$0xff]
        %v759 = vld [vmem:[%s341 + $0x78] sm:$0xff]
        %760 = vset.pattern.permute.xlu0 0
        %761 = vperm.xlu0 %760, %v744
        %v762 = vpop.permute.xlu0 %761
        %763 = vset.pattern.permute.xlu0 0
        %764 = vperm.xlu0 %763, %v745
        %v765 = vpop.permute.xlu0 %764
        %766 = vset.pattern.permute.xlu0 0
        %767 = vperm.xlu0 %766, %v746
        %v768 = vpop.permute.xlu0 %767
        %769 = vset.pattern.permute.xlu0 0
        %770 = vperm.xlu0 %769, %v747
        %v771 = vpop.permute.xlu0 %770
        %772 = vset.pattern.permute.xlu0 0
        %773 = vperm.xlu0 %772, %v748
        %v774 = vpop.permute.xlu0 %773
        %775 = vset.pattern.permute.xlu0 0
        %776 = vperm.xlu0 %775, %v749
        %v777 = vpop.permute.xlu0 %776
        %778 = vset.pattern.permute.xlu0 0
        %779 = vperm.xlu0 %778, %v750
        %v780 = vpop.permute.xlu0 %779
        %781 = vset.pattern.permute.xlu0 0
        %782 = vperm.xlu0 %781, %v751
        %v783 = vpop.permute.xlu0 %782
        %784 = vset.pattern.permute.xlu0 0
        %785 = vperm.xlu0 %784, %v752
        %v786 = vpop.permute.xlu0 %785
        %787 = vset.pattern.permute.xlu0 0
        %788 = vperm.xlu0 %787, %v753
        %v789 = vpop.permute.xlu0 %788
        %790 = vset.pattern.permute.xlu0 0
        %791 = vperm.xlu0 %790, %v754
        %v792 = vpop.permute.xlu0 %791
        %793 = vset.pattern.permute.xlu0 0
        %794 = vperm.xlu0 %793, %v755
        %v795 = vpop.permute.xlu0 %794
        %796 = vset.pattern.permute.xlu0 0
        %797 = vperm.xlu0 %796, %v756
        %v798 = vpop.permute.xlu0 %797
        %799 = vset.pattern.permute.xlu0 0
        %800 = vperm.xlu0 %799, %v757
        %v801 = vpop.permute.xlu0 %800
        %802 = vset.pattern.permute.xlu0 0
        %803 = vperm.xlu0 %802, %v758
        %v804 = vpop.permute.xlu0 %803
        %805 = vset.pattern.permute.xlu0 0
        %806 = vperm.xlu0 %805, %v759
        %v807 = vpop.permute.xlu0 %806
        %vm808 = vcmp.eq.s32.totalorder %v743, %v762
        %vm809 = vcmp.eq.s32.totalorder %v743, %v765
        %vm810 = vcmp.eq.s32.totalorder %v743, %v768
        %vm811 = vcmp.eq.s32.totalorder %v743, %v771
        %vm812 = vcmp.eq.s32.totalorder %v743, %v774
        %vm813 = vcmp.eq.s32.totalorder %v743, %v777
        %vm814 = vcmp.eq.s32.totalorder %v743, %v780
        %vm815 = vcmp.eq.s32.totalorder %v743, %v783
        %vm816 = vcmp.eq.s32.totalorder %v743, %v786
        %vm817 = vcmp.eq.s32.totalorder %v743, %v789
        %vm818 = vcmp.eq.s32.totalorder %v743, %v792
        %vm819 = vcmp.eq.s32.totalorder %v743, %v795
        %vm820 = vcmp.eq.s32.totalorder %v743, %v798
        %vm821 = vcmp.eq.s32.totalorder %v743, %v801
        %vm822 = vcmp.eq.s32.totalorder %v743, %v804
        %vm823 = vcmp.eq.s32.totalorder %v743, %v807
        %v824 = vsel %vm808, 1, 0
        %v825 = vsel %vm809, 1, 0
        %v826 = vsel %vm810, 1, 0
        %v827 = vsel %vm811, 1, 0
        %v828 = vsel %vm812, 1, 0
        %v829 = vsel %vm813, 1, 0
        %v830 = vsel %vm814, 1, 0
        %v831 = vsel %vm815, 1, 0
        %v832 = vsel %vm816, 1, 0
        %v833 = vsel %vm817, 1, 0
        %v834 = vsel %vm818, 1, 0
        %v835 = vsel %vm819, 1, 0
        %v836 = vsel %vm820, 1, 0
        %v837 = vsel %vm821, 1, 0
        %v838 = vsel %vm822, 1, 0
        %v839 = vsel %vm823, 1, 0
        %v840 = vcvt.s32.f32 %v824
        %v841 = vcvt.s32.f32 %v825
        %v842 = vcvt.s32.f32 %v826
        %v843 = vcvt.s32.f32 %v827
        %v844 = vcvt.s32.f32 %v828
        %v845 = vcvt.s32.f32 %v829
        %v846 = vcvt.s32.f32 %v830
        %v847 = vcvt.s32.f32 %v831
        %v848 = vcvt.s32.f32 %v832
        %v849 = vcvt.s32.f32 %v833
        %v850 = vcvt.s32.f32 %v834
        %v851 = vcvt.s32.f32 %v835
        %v852 = vcvt.s32.f32 %v836
        %v853 = vcvt.s32.f32 %v837
        %v854 = vcvt.s32.f32 %v838
        %v855 = vcvt.s32.f32 %v839
        %v856 = vld [vmem:[#allocation4] sm:$0xff]
        %857 = vmax.xlane.f32.xlu0 %v738
        %v858 = vpop.xlane.xlu0 %857
        %v859 = vmax.f32 %v856, %v858
        %861 = vset.pattern.permute.xlu0 0
        %862 = vperm.xlu0 %861, %v859
        %v863 = vpop.permute.xlu0 %862
        %v865 = vsub.f32 %v738, %v863
        %v866 = vmul.f32 %v865, 1.442695
        %v867 = vpow.pop %v866
        %v868 = vld [vmem:[#allocation5] sm:$0xff]
        %v869 = vsub.f32 %v856, %v859
        %v870 = vmul.f32 %v869, 1.442695
        %v871 = vpow.pop %v870
        %873 = vset.pattern.permute.xlu0 0
        %874 = vperm.xlu0 %873, %v871
        %v875 = vpop.permute.xlu0 %874
        %v877 = vmul.f32 %v868, %v875
        %878 = vmatprep.subr.mxu0 0.0
        %879 = vmatpush1.msra.mxu0 %v840
        %880 = vmatprep.subr.mxu0 0.0
        %881 = vmatpush1.msra.mxu0 %v841
        %882 = vmatprep.subr.mxu0 0.0
        %883 = vmatpush1.msra.mxu0 %v842
        %884 = vmatprep.subr.mxu0 0.0
        %885 = vmatpush1.msra.mxu0 %v843
        %886 = vmatprep.subr.mxu0 0.0
        %887 = vmatpush1.msra.mxu0 %v844
        %888 = vmatprep.subr.mxu0 0.0
        %889 = vmatpush1.msra.mxu0 %v845
        %890 = vmatprep.subr.mxu0 0.0
        %891 = vmatpush1.msra.mxu0 %v846
        %892 = vmatprep.subr.mxu0 0.0
        %893 = vmatpush1.msra.mxu0 %v847
        %894 = vmatprep.subr.mxu0 0.0
        %895 = vmatpush1.msra.mxu0 %v848
        %896 = vmatprep.subr.mxu0 0.0
        %897 = vmatpush1.msra.mxu0 %v849
        %898 = vmatprep.subr.mxu0 0.0
        %899 = vmatpush1.msra.mxu0 %v850
        %900 = vmatprep.subr.mxu0 0.0
        %901 = vmatpush1.msra.mxu0 %v851
        %902 = vmatprep.subr.mxu0 0.0
        %903 = vmatpush1.msra.mxu0 %v852
        %904 = vmatprep.subr.mxu0 0.0
        %905 = vmatpush1.msra.mxu0 %v853
        %906 = vmatprep.subr.mxu0 0.0
        %907 = vmatpush1.msra.mxu0 %v854
        %908 = vmatprep.subr.mxu0 0.0
        %909 = vmatpush1.msra.mxu0 %v855
        %910 = vmatprep.subr.mxu0 0.0
        %911 = vmatpush1.msra.mxu0 0.0
        %912 = vmatprep.subr.mxu0 0.0
        %913 = vmatpush1.msra.mxu0 0.0
        %914 = vmatprep.subr.mxu0 0.0
        %915 = vmatpush1.msra.mxu0 0.0
        %916 = vmatprep.subr.mxu0 0.0
        %917 = vmatpush1.msra.mxu0 0.0
        %918 = vmatprep.subr.mxu0 0.0
        %919 = vmatpush1.msra.mxu0 0.0
        %920 = vmatprep.subr.mxu0 0.0
        %921 = vmatpush1.msra.mxu0 0.0
        %922 = vmatprep.subr.mxu0 0.0
        %923 = vmatpush1.msra.mxu0 0.0
        %924 = vmatprep.subr.mxu0 0.0
        %925 = vmatpush1.msra.mxu0 0.0
        %926 = vmatprep.subr.mxu0 0.0
        %927 = vmatpush1.msra.mxu0 0.0
        %928 = vmatprep.subr.mxu0 0.0
        %929 = vmatpush1.msra.mxu0 0.0
        %930 = vmatprep.subr.mxu0 0.0
        %931 = vmatpush1.msra.mxu0 0.0
        %932 = vmatprep.subr.mxu0 0.0
        %933 = vmatpush1.msra.mxu0 0.0
        %934 = vmatprep.subr.mxu0 0.0
        %935 = vmatpush1.msra.mxu0 0.0
        %936 = vmatprep.subr.mxu0 0.0
        %937 = vmatpush1.msra.mxu0 0.0
        %938 = vmatprep.subr.mxu0 0.0
        %939 = vmatpush1.msra.mxu0 0.0
        %940 = vmatprep.subr.mxu0 0.0
        %941 = vmatpush1.msra.mxu0 0.0
        %942 = vmatprep.mubr.f32.mxu0 0.0
        %943 = vmatmul.mubr.f32.gmra.mrb[0].mxu0 %v867
        %v944 = vpop.f32.mrb[0].mxu0
        %v945 = vadd.f32 0.0, %v944
        %v946 = vpop.f32.mrb[0].mxu0
        %947 = vdwg.mxu0
        %v948 = vadd.f32 %v877, %v945
        %949 = vst.msk [vmem:[#allocation5] sm:$0xff] %vm589, %v948
        %vm950 = vcmask 7168
        %951 = vst.msk [vmem:[#allocation4] sm:$0xff] %vm950, %v859
      $region60: #{tpu_custom_call.1} parent=51 // pred_fallthru
        _
      %p952 = scmp.eq.s32.totalorder %s23, 1
      // Predicated region
      $region61: #{tpu_custom_call.1} parent=51 // pred_check
        %p953 = pneg %p952
      $region62: #{tpu_custom_call.1} parent=51 // pred_check_branch
        %955 = sbr.rel (%p953) target = $region64
      $region63: #{tpu_custom_call.1} parent=51 // pred_region
        // Predicated region
        $region65: #{tpu_custom_call.1} parent=63 // pred_check
          %p956 = pneg %p356
        $region66: #{tpu_custom_call.1} parent=63 // pred_check_branch
          %958 = sbr.rel (%p956) target = $region68
        $region67: #{tpu_custom_call.1} parent=63 // pred_region
          %vm959 = vcmask 261120
          %960 = vst.msk [vmem:[%s8] sm:$0xff] %vm959, 0.0
          %961 = vst.msk [vmem:[%s8 + $0x8] sm:$0xff] %vm959, 0.0
          %962 = vst.msk [vmem:[%s8 + $0x10] sm:$0xff] %vm959, 0.0
          %963 = vst.msk [vmem:[%s8 + $0x18] sm:$0xff] %vm959, 0.0
          %964 = vst.msk [vmem:[%s8 + $0x20] sm:$0xff] %vm959, 0.0
          %965 = vst.msk [vmem:[%s8 + $0x28] sm:$0xff] %vm959, 0.0
          %966 = vst.msk [vmem:[%s8 + $0x30] sm:$0xff] %vm959, 0.0
          %967 = vst.msk [vmem:[%s8 + $0x38] sm:$0xff] %vm959, 0.0
        $region68: #{tpu_custom_call.1} parent=63 // pred_fallthru
          _
        %v968 = vlaneseq
        %v969 = vand.u32 %v968, 127
        %v970 = vld [vmem:[%s347] sm:$0xff]
        %v971 = vld [vmem:[%s347 + $0x8] sm:$0xff]
        %v972 = vld [vmem:[%s347 + $0x10] sm:$0xff]
        %v973 = vld [vmem:[%s347 + $0x18] sm:$0xff]
        %v974 = vld [vmem:[%s347 + $0x20] sm:$0xff]
        %v975 = vld [vmem:[%s347 + $0x28] sm:$0xff]
        %v976 = vld [vmem:[%s347 + $0x30] sm:$0xff]
        %v977 = vld [vmem:[%s347 + $0x38] sm:$0xff]
        %v978 = vld [vmem:[%s347 + $0x40] sm:$0xff]
        %v979 = vld [vmem:[%s347 + $0x48] sm:$0xff]
        %v980 = vld [vmem:[%s347 + $0x50] sm:$0xff]
        %v981 = vld [vmem:[%s347 + $0x58] sm:$0xff]
        %v982 = vld [vmem:[%s347 + $0x60] sm:$0xff]
        %v983 = vld [vmem:[%s347 + $0x68] sm:$0xff]
        %v984 = vld [vmem:[%s347 + $0x70] sm:$0xff]
        %v985 = vld [vmem:[%s347 + $0x78] sm:$0xff]
        %986 = vset.pattern.permute.xlu0 0
        %987 = vperm.xlu0 %986, %v970
        %v988 = vpop.permute.xlu0 %987
        %989 = vset.pattern.permute.xlu0 0
        %990 = vperm.xlu0 %989, %v971
        %v991 = vpop.permute.xlu0 %990
        %992 = vset.pattern.permute.xlu0 0
        %993 = vperm.xlu0 %992, %v972
        %v994 = vpop.permute.xlu0 %993
        %995 = vset.pattern.permute.xlu0 0
        %996 = vperm.xlu0 %995, %v973
        %v997 = vpop.permute.xlu0 %996
        %998 = vset.pattern.permute.xlu0 0
        %999 = vperm.xlu0 %998, %v974
        %v1000 = vpop.permute.xlu0 %999
        %1001 = vset.pattern.permute.xlu0 0
        %1002 = vperm.xlu0 %1001, %v975
        %v1003 = vpop.permute.xlu0 %1002
        %1004 = vset.pattern.permute.xlu0 0
        %1005 = vperm.xlu0 %1004, %v976
        %v1006 = vpop.permute.xlu0 %1005
        %1007 = vset.pattern.permute.xlu0 0
        %1008 = vperm.xlu0 %1007, %v977
        %v1009 = vpop.permute.xlu0 %1008
        %1010 = vset.pattern.permute.xlu0 0
        %1011 = vperm.xlu0 %1010, %v978
        %v1012 = vpop.permute.xlu0 %1011
        %1013 = vset.pattern.permute.xlu0 0
        %1014 = vperm.xlu0 %1013, %v979
        %v1015 = vpop.permute.xlu0 %1014
        %1016 = vset.pattern.permute.xlu0 0
        %1017 = vperm.xlu0 %1016, %v980
        %v1018 = vpop.permute.xlu0 %1017
        %1019 = vset.pattern.permute.xlu0 0
        %1020 = vperm.xlu0 %1019, %v981
        %v1021 = vpop.permute.xlu0 %1020
        %1022 = vset.pattern.permute.xlu0 0
        %1023 = vperm.xlu0 %1022, %v982
        %v1024 = vpop.permute.xlu0 %1023
        %1025 = vset.pattern.permute.xlu0 0
        %1026 = vperm.xlu0 %1025, %v983
        %v1027 = vpop.permute.xlu0 %1026
        %1028 = vset.pattern.permute.xlu0 0
        %1029 = vperm.xlu0 %1028, %v984
        %v1030 = vpop.permute.xlu0 %1029
        %1031 = vset.pattern.permute.xlu0 0
        %1032 = vperm.xlu0 %1031, %v985
        %v1033 = vpop.permute.xlu0 %1032
        %vm1034 = vcmp.eq.s32.totalorder %v969, %v988
        %vm1035 = vcmp.eq.s32.totalorder %v969, %v991
        %vm1036 = vcmp.eq.s32.totalorder %v969, %v994
        %vm1037 = vcmp.eq.s32.totalorder %v969, %v997
        %vm1038 = vcmp.eq.s32.totalorder %v969, %v1000
        %vm1039 = vcmp.eq.s32.totalorder %v969, %v1003
        %vm1040 = vcmp.eq.s32.totalorder %v969, %v1006
        %vm1041 = vcmp.eq.s32.totalorder %v969, %v1009
        %vm1042 = vcmp.eq.s32.totalorder %v969, %v1012
        %vm1043 = vcmp.eq.s32.totalorder %v969, %v1015
        %vm1044 = vcmp.eq.s32.totalorder %v969, %v1018
        %vm1045 = vcmp.eq.s32.totalorder %v969, %v1021
        %vm1046 = vcmp.eq.s32.totalorder %v969, %v1024
        %vm1047 = vcmp.eq.s32.totalorder %v969, %v1027
        %vm1048 = vcmp.eq.s32.totalorder %v969, %v1030
        %vm1049 = vcmp.eq.s32.totalorder %v969, %v1033
        %v1050 = vsel %vm1034, 1, 0
        %v1051 = vsel %vm1035, 1, 0
        %v1052 = vsel %vm1036, 1, 0
        %v1053 = vsel %vm1037, 1, 0
        %v1054 = vsel %vm1038, 1, 0
        %v1055 = vsel %vm1039, 1, 0
        %v1056 = vsel %vm1040, 1, 0
        %v1057 = vsel %vm1041, 1, 0
        %v1058 = vsel %vm1042, 1, 0
        %v1059 = vsel %vm1043, 1, 0
        %v1060 = vsel %vm1044, 1, 0
        %v1061 = vsel %vm1045, 1, 0
        %v1062 = vsel %vm1046, 1, 0
        %v1063 = vsel %vm1047, 1, 0
        %v1064 = vsel %vm1048, 1, 0
        %v1065 = vsel %vm1049, 1, 0
        %v1066 = vcvt.s32.f32 %v1050
        %v1067 = vcvt.s32.f32 %v1051
        %v1068 = vcvt.s32.f32 %v1052
        %v1069 = vcvt.s32.f32 %v1053
        %v1070 = vcvt.s32.f32 %v1054
        %v1071 = vcvt.s32.f32 %v1055
        %v1072 = vcvt.s32.f32 %v1056
        %v1073 = vcvt.s32.f32 %v1057
        %v1074 = vcvt.s32.f32 %v1058
        %v1075 = vcvt.s32.f32 %v1059
        %v1076 = vcvt.s32.f32 %v1060
        %v1077 = vcvt.s32.f32 %v1061
        %v1078 = vcvt.s32.f32 %v1062
        %v1079 = vcvt.s32.f32 %v1063
        %v1080 = vcvt.s32.f32 %v1064
        %v1081 = vcvt.s32.f32 %v1065
        %v1082 = vld [vmem:[#allocation4] sm:$0xff]
        %1084 = vset.pattern.permute.xlu0 0
        %1085 = vperm.xlu0 %1084, %v1082
        %v1086 = vpop.permute.xlu0 %1085
        %v1088 = vsub.f32 %v738, %v1086
        %v1089 = vmul.f32 %v1088, 1.442695
        %v1090 = vpow.pop %v1089
        %v1091 = vld [vmem:[#allocation5] sm:$0xff]
        %v1093 = vsel %vm589, %v1091, 0
        %1095 = vmatprep.subr.mxu0 0.0
        %1096 = vmatpush1.msra.mxu0 %v550
        %1097 = vmatprep.subr.mxu0 0.0
        %1098 = vmatpush1.msra.mxu0 %v551
        %1099 = vmatprep.subr.mxu0 0.0
        %1100 = vmatpush1.msra.mxu0 %v552
        %1101 = vmatprep.subr.mxu0 0.0
        %1102 = vmatpush1.msra.mxu0 %v553
        %1103 = vmatprep.subr.mxu0 0.0
        %1104 = vmatpush1.msra.mxu0 %v554
        %1105 = vmatprep.subr.mxu0 0.0
        %1106 = vmatpush1.msra.mxu0 %v555
        %1107 = vmatprep.subr.mxu0 0.0
        %1108 = vmatpush1.msra.mxu0 %v556
        %1109 = vmatprep.subr.mxu0 0.0
        %1110 = vmatpush1.msra.mxu0 %v557
        %1111 = vmatprep.subr.mxu0 0.0
        %1112 = vmatpush1.msra.mxu0 0.0
        %1113 = vmatprep.subr.mxu0 0.0
        %1114 = vmatpush1.msra.mxu0 0.0
        %1115 = vmatprep.subr.mxu0 0.0
        %1116 = vmatpush1.msra.mxu0 0.0
        %1117 = vmatprep.subr.mxu0 0.0
        %1118 = vmatpush1.msra.mxu0 0.0
        %1119 = vmatprep.subr.mxu0 0.0
        %1120 = vmatpush1.msra.mxu0 0.0
        %1121 = vmatprep.subr.mxu0 0.0
        %1122 = vmatpush1.msra.mxu0 0.0
        %1123 = vmatprep.subr.mxu0 0.0
        %1124 = vmatpush1.msra.mxu0 0.0
        %1125 = vmatprep.subr.mxu0 0.0
        %1126 = vmatpush1.msra.mxu0 0.0
        %1127 = vmatprep.subr.mxu0 0.0
        %1128 = vmatpush1.msra.mxu0 0.0
        %1129 = vmatprep.subr.mxu0 0.0
        %1130 = vmatpush1.msra.mxu0 0.0
        %1131 = vmatprep.subr.mxu0 0.0
        %1132 = vmatpush1.msra.mxu0 0.0
        %1133 = vmatprep.subr.mxu0 0.0
        %1134 = vmatpush1.msra.mxu0 0.0
        %1135 = vmatprep.subr.mxu0 0.0
        %1136 = vmatpush1.msra.mxu0 0.0
        %1137 = vmatprep.subr.mxu0 0.0
        %1138 = vmatpush1.msra.mxu0 0.0
        %1139 = vmatprep.subr.mxu0 0.0
        %1140 = vmatpush1.msra.mxu0 0.0
        %1141 = vmatprep.subr.mxu0 0.0
        %1142 = vmatpush1.msra.mxu0 0.0
        %1143 = vmatprep.subr.mxu0 0.0
        %1144 = vmatpush1.msra.mxu0 0.0
        %1145 = vmatprep.subr.mxu0 0.0
        %1146 = vmatpush1.msra.mxu0 0.0
        %1147 = vmatprep.subr.mxu0 0.0
        %1148 = vmatpush1.msra.mxu0 0.0
        %1149 = vmatprep.subr.mxu0 0.0
        %1150 = vmatpush1.msra.mxu0 0.0
        %1151 = vmatprep.subr.mxu0 0.0
        %1152 = vmatpush1.msra.mxu0 0.0
        %1153 = vmatprep.subr.mxu0 0.0
        %1154 = vmatpush1.msra.mxu0 0.0
        %1155 = vmatprep.subr.mxu0 0.0
        %1156 = vmatpush1.msra.mxu0 0.0
        %1157 = vmatprep.subr.mxu0 0.0
        %1158 = vmatpush1.msra.mxu0 0.0
        %1159 = vmatprep.mubr.f32.mxu0 0.0
        %1160 = vmatmul.mubr.f32.gmra.mrb[0].mxu0 %v1093
        %v1161 = vpop.f32.mrb[0].mxu0
        %v1162 = vadd.f32 1e-16, %v1161
        %v1163 = vpop.f32.mrb[0].mxu0
        %1164 = vdwg.mxu0
        %v1165 = vrcp.pop %v1162
        %v1166 = vmul.f32 %v1090, %v1165
        %v1167 = vrot.slane %v1166, 4
        %v1168 = vadd.f32 %v1166, %v1167
        %v1169 = vrot.slane %v1168, 2
        %v1170 = vadd.f32 %v1168, %v1169
        %v1171 = vrot.slane %v1170, 1
        %v1172 = vadd.f32 %v1170, %v1171
        %v1173 = vmul.f32 %v1172, 0.125
        %v1174 = vld [vmem:[%s0] sm:$0xff]
        %v1175 = vld [vmem:[%s0 + $0x8] sm:$0xff]
        %v1176 = vld [vmem:[%s0 + $0x10] sm:$0xff]
        %v1177 = vld [vmem:[%s0 + $0x18] sm:$0xff]
        %v1178 = vld [vmem:[%s0 + $0x20] sm:$0xff]
        %v1179 = vld [vmem:[%s0 + $0x28] sm:$0xff]
        %v1180 = vld [vmem:[%s0 + $0x30] sm:$0xff]
        %v1181 = vld [vmem:[%s0 + $0x38] sm:$0xff]
        %v1183 = vsel %vm589, %v1066, 0
        %v1186 = vsel %vm589, %v1067, 0
        %v1189 = vsel %vm589, %v1068, 0
        %v1192 = vsel %vm589, %v1069, 0
        %v1195 = vsel %vm589, %v1070, 0
        %v1198 = vsel %vm589, %v1071, 0
        %v1201 = vsel %vm589, %v1072, 0
        %v1204 = vsel %vm589, %v1073, 0
        %v1207 = vsel %vm589, %v1074, 0
        %v1210 = vsel %vm589, %v1075, 0
        %v1213 = vsel %vm589, %v1076, 0
        %v1216 = vsel %vm589, %v1077, 0
        %v1219 = vsel %vm589, %v1078, 0
        %v1222 = vsel %vm589, %v1079, 0
        %v1225 = vsel %vm589, %v1080, 0
        %v1228 = vsel %vm589, %v1081, 0
        %1230 = vmatprep.subr.mxu0 0.0
        %1231 = vmatpush1.msra.mxu0 %v1174
        %1232 = vmatprep.subr.mxu0 0.0
        %1233 = vmatpush1.msra.mxu0 %v1175
        %1234 = vmatprep.subr.mxu0 0.0
        %1235 = vmatpush1.msra.mxu0 %v1176
        %1236 = vmatprep.subr.mxu0 0.0
        %1237 = vmatpush1.msra.mxu0 %v1177
        %1238 = vmatprep.subr.mxu0 0.0
        %1239 = vmatpush1.msra.mxu0 %v1178
        %1240 = vmatprep.subr.mxu0 0.0
        %1241 = vmatpush1.msra.mxu0 %v1179
        %1242 = vmatprep.subr.mxu0 0.0
        %1243 = vmatpush1.msra.mxu0 %v1180
        %1244 = vmatprep.subr.mxu0 0.0
        %1245 = vmatpush1.msra.mxu0 %v1181
        %1246 = vmatprep.subr.mxu0 0.0
        %1247 = vmatpush1.msra.mxu0 0.0
        %1248 = vmatprep.subr.mxu0 0.0
        %1249 = vmatpush1.msra.mxu0 0.0
        %1250 = vmatprep.subr.mxu0 0.0
        %1251 = vmatpush1.msra.mxu0 0.0
        %1252 = vmatprep.subr.mxu0 0.0
        %1253 = vmatpush1.msra.mxu0 0.0
        %1254 = vmatprep.subr.mxu0 0.0
        %1255 = vmatpush1.msra.mxu0 0.0
        %1256 = vmatprep.subr.mxu0 0.0
        %1257 = vmatpush1.msra.mxu0 0.0
        %1258 = vmatprep.subr.mxu0 0.0
        %1259 = vmatpush1.msra.mxu0 0.0
        %1260 = vmatprep.subr.mxu0 0.0
        %1261 = vmatpush1.msra.mxu0 0.0
        %1262 = vmatprep.subr.mxu0 0.0
        %1263 = vmatpush1.msra.mxu0 0.0
        %1264 = vmatprep.subr.mxu0 0.0
        %1265 = vmatpush1.msra.mxu0 0.0
        %1266 = vmatprep.subr.mxu0 0.0
        %1267 = vmatpush1.msra.mxu0 0.0
        %1268 = vmatprep.subr.mxu0 0.0
        %1269 = vmatpush1.msra.mxu0 0.0
        %1270 = vmatprep.subr.mxu0 0.0
        %1271 = vmatpush1.msra.mxu0 0.0
        %1272 = vmatprep.subr.mxu0 0.0
        %1273 = vmatpush1.msra.mxu0 0.0
        %1274 = vmatprep.subr.mxu0 0.0
        %1275 = vmatpush1.msra.mxu0 0.0
        %1276 = vmatprep.subr.mxu0 0.0
        %1277 = vmatpush1.msra.mxu0 0.0
        %1278 = vmatprep.subr.mxu0 0.0
        %1279 = vmatpush1.msra.mxu0 0.0
        %1280 = vmatprep.subr.mxu0 0.0
        %1281 = vmatpush1.msra.mxu0 0.0
        %1282 = vmatprep.subr.mxu0 0.0
        %1283 = vmatpush1.msra.mxu0 0.0
        %1284 = vmatprep.subr.mxu0 0.0
        %1285 = vmatpush1.msra.mxu0 0.0
        %1286 = vmatprep.subr.mxu0 0.0
        %1287 = vmatpush1.msra.mxu0 0.0
        %1288 = vmatprep.subr.mxu0 0.0
        %1289 = vmatpush1.msra.mxu0 0.0
        %1290 = vmatprep.subr.mxu0 0.0
        %1291 = vmatpush1.msra.mxu0 0.0
        %1292 = vmatprep.subr.mxu0 0.0
        %1293 = vmatpush1.msra.mxu0 0.0
        %1294 = vmatprep.mubr.f32.mxu0 0.0
        %1295 = vmatmul.mubr.f32.gmra.mrb[0].mxu0 %v1183
        %v1296 = vpop.f32.mrb[0].mxu0
        %v1297 = vadd.f32 0.0, %v1296
        %v1298 = vpop.f32.mrb[0].mxu0
        %1299 = vmatprep.mubr.f32.mxu0 0.0
        %1300 = vmatmul.mubr.f32.gmra.mrb[0].mxu0 %v1186
        %v1301 = vpop.f32.mrb[0].mxu0
        %v1302 = vadd.f32 0.0, %v1301
        %v1303 = vpop.f32.mrb[0].mxu0
        %1304 = vmatprep.mubr.f32.mxu0 0.0
        %1305 = vmatmul.mubr.f32.gmra.mrb[0].mxu0 %v1189
        %v1306 = vpop.f32.mrb[0].mxu0
        %v1307 = vadd.f32 0.0, %v1306
        %v1308 = vpop.f32.mrb[0].mxu0
        %1309 = vmatprep.mubr.f32.mxu0 0.0
        %1310 = vmatmul.mubr.f32.gmra.mrb[0].mxu0 %v1192
        %v1311 = vpop.f32.mrb[0].mxu0
        %v1312 = vadd.f32 0.0, %v1311
        %v1313 = vpop.f32.mrb[0].mxu0
        %1314 = vmatprep.mubr.f32.mxu0 0.0
        %1315 = vmatmul.mubr.f32.gmra.mrb[0].mxu0 %v1195
        %v1316 = vpop.f32.mrb[0].mxu0
        %v1317 = vadd.f32 0.0, %v1316
        %v1318 = vpop.f32.mrb[0].mxu0
        %1319 = vmatprep.mubr.f32.mxu0 0.0
        %1320 = vmatmul.mubr.f32.gmra.mrb[0].mxu0 %v1198
        %v1321 = vpop.f32.mrb[0].mxu0
        %v1322 = vadd.f32 0.0, %v1321
        %v1323 = vpop.f32.mrb[0].mxu0
        %1324 = vmatprep.mubr.f32.mxu0 0.0
        %1325 = vmatmul.mubr.f32.gmra.mrb[0].mxu0 %v1201
        %v1326 = vpop.f32.mrb[0].mxu0
        %v1327 = vadd.f32 0.0, %v1326
        %v1328 = vpop.f32.mrb[0].mxu0
        %1329 = vmatprep.mubr.f32.mxu0 0.0
        %1330 = vmatmul.mubr.f32.gmra.mrb[0].mxu0 %v1204
        %v1331 = vpop.f32.mrb[0].mxu0
        %v1332 = vadd.f32 0.0, %v1331
        %v1333 = vpop.f32.mrb[0].mxu0
        %1334 = vmatprep.mubr.f32.mxu0 0.0
        %1335 = vmatmul.mubr.f32.gmra.mrb[0].mxu0 %v1207
        %v1336 = vpop.f32.mrb[0].mxu0
        %v1337 = vadd.f32 0.0, %v1336
        %v1338 = vpop.f32.mrb[0].mxu0
        %1339 = vmatprep.mubr.f32.mxu0 0.0
        %1340 = vmatmul.mubr.f32.gmra.mrb[0].mxu0 %v1210
        %v1341 = vpop.f32.mrb[0].mxu0
        %v1342 = vadd.f32 0.0, %v1341
        %v1343 = vpop.f32.mrb[0].mxu0
        %1344 = vmatprep.mubr.f32.mxu0 0.0
        %1345 = vmatmul.mubr.f32.gmra.mrb[0].mxu0 %v1213
        %v1346 = vpop.f32.mrb[0].mxu0
        %v1347 = vadd.f32 0.0, %v1346
        %v1348 = vpop.f32.mrb[0].mxu0
        %1349 = vmatprep.mubr.f32.mxu0 0.0
        %1350 = vmatmul.mubr.f32.gmra.mrb[0].mxu0 %v1216
        %v1351 = vpop.f32.mrb[0].mxu0
        %v1352 = vadd.f32 0.0, %v1351
        %v1353 = vpop.f32.mrb[0].mxu0
        %1354 = vmatprep.mubr.f32.mxu0 0.0
        %1355 = vmatmul.mubr.f32.gmra.mrb[0].mxu0 %v1219
        %v1356 = vpop.f32.mrb[0].mxu0
        %v1357 = vadd.f32 0.0, %v1356
        %v1358 = vpop.f32.mrb[0].mxu0
        %1359 = vmatprep.mubr.f32.mxu0 0.0
        %1360 = vmatmul.mubr.f32.gmra.mrb[0].mxu0 %v1222
        %v1361 = vpop.f32.mrb[0].mxu0
        %v1362 = vadd.f32 0.0, %v1361
        %v1363 = vpop.f32.mrb[0].mxu0
        %1364 = vmatprep.mubr.f32.mxu0 0.0
        %1365 = vmatmul.mubr.f32.gmra.mrb[0].mxu0 %v1225
        %v1366 = vpop.f32.mrb[0].mxu0
        %v1367 = vadd.f32 0.0, %v1366
        %v1368 = vpop.f32.mrb[0].mxu0
        %1369 = vmatprep.mubr.f32.mxu0 0.0
        %1370 = vmatmul.mubr.f32.gmra.mrb[0].mxu0 %v1228
        %v1371 = vpop.f32.mrb[0].mxu0
        %v1372 = vadd.f32 0.0, %v1371
        %v1373 = vpop.f32.mrb[0].mxu0
        %1374 = vdwg.mxu0
        %v1375 = vld [vmem:[%s8] sm:$0xff]
        %v1376 = vld [vmem:[%s8 + $0x8] sm:$0xff]
        %v1377 = vld [vmem:[%s8 + $0x10] sm:$0xff]
        %v1378 = vld [vmem:[%s8 + $0x18] sm:$0xff]
        %v1379 = vld [vmem:[%s8 + $0x20] sm:$0xff]
        %v1380 = vld [vmem:[%s8 + $0x28] sm:$0xff]
        %v1381 = vld [vmem:[%s8 + $0x30] sm:$0xff]
        %v1382 = vld [vmem:[%s8 + $0x38] sm:$0xff]
        %v1383 = vmul.f32 %v550, %v1173
        %v1384 = vmul.f32 %v551, %v1173
        %v1385 = vmul.f32 %v552, %v1173
        %v1386 = vmul.f32 %v553, %v1173
        %v1387 = vmul.f32 %v554, %v1173
        %v1388 = vmul.f32 %v555, %v1173
        %v1389 = vmul.f32 %v556, %v1173
        %v1390 = vmul.f32 %v557, %v1173
        %1391 = vmatprep.subr.mxu0 0.0
        %1392 = vmatpush1.msra.mxu0 %v1297
        %1393 = vmatprep.subr.mxu0 0.0
        %1394 = vmatpush1.msra.mxu0 %v1302
        %1395 = vmatprep.subr.mxu0 0.0
        %1396 = vmatpush1.msra.mxu0 %v1307
        %1397 = vmatprep.subr.mxu0 0.0
        %1398 = vmatpush1.msra.mxu0 %v1312
        %1399 = vmatprep.subr.mxu0 0.0
        %1400 = vmatpush1.msra.mxu0 %v1317
        %1401 = vmatprep.subr.mxu0 0.0
        %1402 = vmatpush1.msra.mxu0 %v1322
        %1403 = vmatprep.subr.mxu0 0.0
        %1404 = vmatpush1.msra.mxu0 %v1327
        %1405 = vmatprep.subr.mxu0 0.0
        %1406 = vmatpush1.msra.mxu0 %v1332
        %1407 = vmatprep.subr.mxu0 0.0
        %1408 = vmatpush1.msra.mxu0 %v1337
        %1409 = vmatprep.subr.mxu0 0.0
        %1410 = vmatpush1.msra.mxu0 %v1342
        %1411 = vmatprep.subr.mxu0 0.0
        %1412 = vmatpush1.msra.mxu0 %v1347
        %1413 = vmatprep.subr.mxu0 0.0
        %1414 = vmatpush1.msra.mxu0 %v1352
        %1415 = vmatprep.subr.mxu0 0.0
        %1416 = vmatpush1.msra.mxu0 %v1357
        %1417 = vmatprep.subr.mxu0 0.0
        %1418 = vmatpush1.msra.mxu0 %v1362
        %1419 = vmatprep.subr.mxu0 0.0
        %1420 = vmatpush1.msra.mxu0 %v1367
        %1421 = vmatprep.subr.mxu0 0.0
        %1422 = vmatpush1.msra.mxu0 %v1372
        %1423 = vmatprep.subr.mxu0 0.0
        %1424 = vmatpush1.msra.mxu0 0.0
        %1425 = vmatprep.subr.mxu0 0.0
        %1426 = vmatpush1.msra.mxu0 0.0
        %1427 = vmatprep.subr.mxu0 0.0
        %1428 = vmatpush1.msra.mxu0 0.0
        %1429 = vmatprep.subr.mxu0 0.0
        %1430 = vmatpush1.msra.mxu0 0.0
        %1431 = vmatprep.subr.mxu0 0.0
        %1432 = vmatpush1.msra.mxu0 0.0
        %1433 = vmatprep.subr.mxu0 0.0
        %1434 = vmatpush1.msra.mxu0 0.0
        %1435 = vmatprep.subr.mxu0 0.0
        %1436 = vmatpush1.msra.mxu0 0.0
        %1437 = vmatprep.subr.mxu0 0.0
        %1438 = vmatpush1.msra.mxu0 0.0
        %1439 = vmatprep.subr.mxu0 0.0
        %1440 = vmatpush1.msra.mxu0 0.0
        %1441 = vmatprep.subr.mxu0 0.0
        %1442 = vmatpush1.msra.mxu0 0.0
        %1443 = vmatprep.subr.mxu0 0.0
        %1444 = vmatpush1.msra.mxu0 0.0
        %1445 = vmatprep.subr.mxu0 0.0
        %1446 = vmatpush1.msra.mxu0 0.0
        %1447 = vmatprep.subr.mxu0 0.0
        %1448 = vmatpush1.msra.mxu0 0.0
        %1449 = vmatprep.subr.mxu0 0.0
        %1450 = vmatpush1.msra.mxu0 0.0
        %1451 = vmatprep.subr.mxu0 0.0
        %1452 = vmatpush1.msra.mxu0 0.0
        %1453 = vmatprep.subr.mxu0 0.0
        %1454 = vmatpush1.msra.mxu0 0.0
        %1455 = vmatprep.mubr.f32.mxu0 0.0
        %1456 = vmatmul.mubr.f32.gmra.mrb[0].mxu0 %v1383
        %v1457 = vpop.f32.mrb[0].mxu0
        %v1458 = vadd.f32 0.0, %v1457
        %v1459 = vpop.f32.mrb[0].mxu0
        %1460 = vmatprep.mubr.f32.mxu0 0.0
        %1461 = vmatmul.mubr.f32.gmra.mrb[0].mxu0 %v1384
        %v1462 = vpop.f32.mrb[0].mxu0
        %v1463 = vadd.f32 0.0, %v1462
        %v1464 = vpop.f32.mrb[0].mxu0
        %1465 = vmatprep.mubr.f32.mxu0 0.0
        %1466 = vmatmul.mubr.f32.gmra.mrb[0].mxu0 %v1385
        %v1467 = vpop.f32.mrb[0].mxu0
        %v1468 = vadd.f32 0.0, %v1467
        %v1469 = vpop.f32.mrb[0].mxu0
        %1470 = vmatprep.mubr.f32.mxu0 0.0
        %1471 = vmatmul.mubr.f32.gmra.mrb[0].mxu0 %v1386
        %v1472 = vpop.f32.mrb[0].mxu0
        %v1473 = vadd.f32 0.0, %v1472
        %v1474 = vpop.f32.mrb[0].mxu0
        %1475 = vmatprep.mubr.f32.mxu0 0.0
        %1476 = vmatmul.mubr.f32.gmra.mrb[0].mxu0 %v1387
        %v1477 = vpop.f32.mrb[0].mxu0
        %v1478 = vadd.f32 0.0, %v1477
        %v1479 = vpop.f32.mrb[0].mxu0
        %1480 = vmatprep.mubr.f32.mxu0 0.0
        %1481 = vmatmul.mubr.f32.gmra.mrb[0].mxu0 %v1388
        %v1482 = vpop.f32.mrb[0].mxu0
        %v1483 = vadd.f32 0.0, %v1482
        %v1484 = vpop.f32.mrb[0].mxu0
        %1485 = vmatprep.mubr.f32.mxu0 0.0
        %1486 = vmatmul.mubr.f32.gmra.mrb[0].mxu0 %v1389
        %v1487 = vpop.f32.mrb[0].mxu0
        %v1488 = vadd.f32 0.0, %v1487
        %v1489 = vpop.f32.mrb[0].mxu0
        %1490 = vmatprep.mubr.f32.mxu0 0.0
        %1491 = vmatmul.mubr.f32.gmra.mrb[0].mxu0 %v1390
        %v1492 = vpop.f32.mrb[0].mxu0
        %v1493 = vadd.f32 0.0, %v1492
        %v1494 = vpop.f32.mrb[0].mxu0
        %1495 = vdwg.mxu0
        %v1496 = vadd.f32 %v1375, %v1458
        %v1497 = vadd.f32 %v1376, %v1463
        %v1498 = vadd.f32 %v1377, %v1468
        %v1499 = vadd.f32 %v1378, %v1473
        %v1500 = vadd.f32 %v1379, %v1478
        %v1501 = vadd.f32 %v1380, %v1483
        %v1502 = vadd.f32 %v1381, %v1488
        %v1503 = vadd.f32 %v1382, %v1493
        %vm1504 = vcmask 261120
        %1505 = vst.msk [vmem:[%s8] sm:$0xff] %vm1504, %v1496
        %1506 = vst.msk [vmem:[%s8 + $0x8] sm:$0xff] %vm1504, %v1497
        %1507 = vst.msk [vmem:[%s8 + $0x10] sm:$0xff] %vm1504, %v1498
        %1508 = vst.msk [vmem:[%s8 + $0x18] sm:$0xff] %vm1504, %v1499
        %1509 = vst.msk [vmem:[%s8 + $0x20] sm:$0xff] %vm1504, %v1500
        %1510 = vst.msk [vmem:[%s8 + $0x28] sm:$0xff] %vm1504, %v1501
        %1511 = vst.msk [vmem:[%s8 + $0x30] sm:$0xff] %vm1504, %v1502
        %1512 = vst.msk [vmem:[%s8 + $0x38] sm:$0xff] %vm1504, %v1503
      $region64: #{tpu_custom_call.1} parent=51 // pred_fallthru
        _
      // Predicated region
      $region69: #{tpu_custom_call.1} parent=51 // pred_check
        %p1513 = pneg %p232
      $region70: #{tpu_custom_call.1} parent=51 // pred_check_branch
        %1515 = sbr.rel (%p1513) target = $region72
      $region71: #{tpu_custom_call.1} parent=51 // pred_region
        _
      $region72: #{tpu_custom_call.1} parent=51 // pred_fallthru
        _
      // Predicated region
      $region73: #{tpu_custom_call.1} parent=51 // pred_check
        %p1516 = pneg %p232
      $region74: #{tpu_custom_call.1} parent=51 // pred_check_branch
        %1518 = sbr.rel (%p1516) target = $region76
      $region75: #{tpu_custom_call.1} parent=51 // pred_region
        _
      $region76: #{tpu_custom_call.1} parent=51 // pred_fallthru
        _
    $region52: #{tpu_custom_call.1} parent=5 // pred_fallthru
      _
    %p1519 = scmp.le.s32.totalorder 2, %s14
    // Predicated region
    $region77: #{tpu_custom_call.1} parent=5 // pred_check
      %p1520 = pneg %p1519
    $region78: #{tpu_custom_call.1} parent=5 // pred_check_branch
      %1522 = sbr.rel (%p1520) target = $region80
    $region79: #{tpu_custom_call.1} parent=5 // pred_region
      %s1523 = ssub.s32 %s14, 2
    $region80: #{tpu_custom_call.1} parent=5 // pred_fallthru
      _
  $region6: #{tpu_custom_call.1} parent=0 // loop_footer
    %s18 = sadd.s32 1, %s14
  $region7: #{tpu_custom_call.1} parent=0 // loop_footer_branch
    %13 = sbr.rel target = $region3
  $region8: #{tpu_custom_call.1} parent=0 // loop_exit
    _

</llo_original>
